<compile_context>
chip_gen: v7x
topology: tpu7x:2x2x1
jax: 0.10.0
libtpu: 0.0.40
codegen_flags: <defaults>
</compile_context>

<pallas_src>
import functools

import jax
import jax.numpy as jnp
from jax import lax
from jax.experimental import pallas as pl
from jax.experimental.pallas import tpu as pltpu

_EPS = 1e-5
_H1, _H2, _H3 = 256, 512, 1024


def _generator_kernel(x_ref,
                      w1_ref, g1_ref, be1_ref,
                      w2_ref, g2_ref, be2_ref,
                      w3_hbm, g3_ref, be3_ref,
                      w4_hbm, b4_ref,
                      o_ref,
                      w3_vmem, w4_vmem, sems):
    # Kick off the big layer-3/4 weight DMAs immediately; they complete while
    # layers 1-2 run (overlap weight HBM traffic with MXU/VPU work).
    cp3 = pltpu.make_async_copy(w3_hbm, w3_vmem, sems.at[0])
    cp4 = pltpu.make_async_copy(w4_hbm, w4_vmem, sems.at[1])
    cp3.start()
    cp4.start()

    def matmul(h, w):
        # bf16 x bf16 MXU matmul, f32 accumulation.
        return jnp.dot(h.astype(jnp.bfloat16), w,
                       preferred_element_type=jnp.float32)

    def bn_relu(h, g_ref, be_ref):
        # Training-mode BatchNorm1d folded to a single per-feature affine:
        #   scale = gamma * rsqrt(var + eps); shift = beta - mean * scale
        # Single-pass biased variance E[h^2] - mean^2, clamped >= 0.
        mean = jnp.mean(h, axis=0, keepdims=True)
        mean_sq = jnp.mean(h * h, axis=0, keepdims=True)
        var = jnp.maximum(mean_sq - mean * mean, 0.0)
        scale = g_ref[...] * lax.rsqrt(var + _EPS)
        shift = be_ref[...] - mean * scale
        return jnp.maximum(h * scale + shift, 0.0)           # fused ReLU

    h = x_ref[...]                                           # f32 activations
    h = bn_relu(matmul(h, w1_ref[...]), g1_ref, be1_ref)
    h = bn_relu(matmul(h, w2_ref[...]), g2_ref, be2_ref)
    cp3.wait()
    h = bn_relu(matmul(h, w3_vmem[...]), g3_ref, be3_ref)
    cp4.wait()
    o_ref[...] = jnp.tanh(matmul(h, w4_vmem[...]) + b4_ref[...])


def prepare_params(params):
    """One-time parameter prep (run OUTSIDE the per-call forward):
    cast weights to bf16 and pad the last layer to a lane-dense width."""
    (w1, b1, g1, be1, w2, b2, g2, be2, w3, b3, g3, be3, w4, b4) = params
    del b1, b2, b3  # bias before training-mode BatchNorm cancels exactly
    out_dim = w4.shape[1]
    out_pad = ((out_dim + 127) // 128) * 128
    w4p = jnp.pad(w4, ((0, 0), (0, out_pad - out_dim)))
    b4p = jnp.pad(b4, ((0, 0), (0, out_pad - out_dim)))
    prep = (w1.astype(jnp.bfloat16), g1, be1,
            w2.astype(jnp.bfloat16), g2, be2,
            w3.astype(jnp.bfloat16), g3, be3,
            w4p.astype(jnp.bfloat16), b4p)
    return prep, out_dim


@functools.partial(jax.jit, static_argnames=("out_dim",))
def generator_forward(x, prep, *, out_dim):
    """x: [B, noise_dim] f32.  prep: output of prepare_params (bf16 weights)."""
    (w1, g1, be1, w2, g2, be2, w3, g3, be3, w4, b4) = prep
    B = x.shape[0]
    noise_dim = x.shape[1]
    out_pad = w4.shape[1]

    inputs = (x, w1, g1, be1, w2, g2, be2, w3, g3, be3, w4, b4)

    flops = 2 * B * (noise_dim * _H1 + _H1 * _H2 + _H2 * _H3 + _H3 * out_pad)
    transcendentals = B * out_pad + (_H1 + _H2 + _H3)        # tanh + rsqrt
    bytes_accessed = (sum(int(a.size) * a.dtype.itemsize for a in inputs)
                      + B * out_pad * 4)

    vmem = pl.BlockSpec(memory_space=pltpu.MemorySpace.VMEM)
    hbm = pl.BlockSpec(memory_space=pl.ANY)                  # manual DMA
    in_specs = [vmem, vmem, vmem, vmem,                      # x, w1, g1, be1
                vmem, vmem, vmem,                            # w2, g2, be2
                hbm, vmem, vmem,                             # w3, g3, be3
                hbm, vmem]                                    # w4, b4

    out = pl.pallas_call(
        _generator_kernel,
        out_shape=jax.ShapeDtypeStruct((B, out_pad), jnp.float32),
        in_specs=in_specs,
        out_specs=vmem,
        scratch_shapes=[
            pltpu.VMEM((_H2, _H3), jnp.bfloat16),            # w3 buffer
            pltpu.VMEM((_H3, out_pad), jnp.bfloat16),        # w4 buffer
            pltpu.SemaphoreType.DMA((2,)),
        ],
        cost_estimate=pl.CostEstimate(flops=flops,
                                      transcendentals=transcendentals,
                                      bytes_accessed=bytes_accessed),
    )(*inputs)
    return out[:, :out_dim]


def init_params(key, noise_dim, output_dim):
    """Deterministic init matching nn.Linear default (U[-1/sqrt(fan_in), +])
    and BatchNorm1d default (gamma=1, beta=0).  Weights stored [in, out]."""
    dims = [noise_dim, _H1, _H2, _H3, output_dim]
    params = []
    keys = jax.random.split(key, 8)
    ki = 0
    for li in range(4):
        fan_in, fan_out = dims[li], dims[li + 1]
        bound = 1.0 / (fan_in ** 0.5)
        w = jax.random.uniform(keys[ki], (fan_in, fan_out), jnp.float32,
                               -bound, bound)
        ki += 1
        b = jax.random.uniform(keys[ki], (1, fan_out), jnp.float32,
                               -bound, bound)
        ki += 1
        params.append(w)
        params.append(b)
        if li < 3:  # BatchNorm after the first three linears
            params.append(jnp.ones((1, fan_out), jnp.float32))   # gamma
            params.append(jnp.zeros((1, fan_out), jnp.float32))  # beta
    return tuple(params)


def reference_forward_f32(x, params):
    """Exact PyTorch-module semantics in f32 (biases included, two-pass var)."""
    (w1, b1, g1, be1, w2, b2, g2, be2, w3, b3, g3, be3, w4, b4) = params

    def bn_relu(h, g, be):
        mean = jnp.mean(h, axis=0, keepdims=True)
        var = jnp.mean(jnp.square(h - mean), axis=0, keepdims=True)
        return jnp.maximum(g * (h - mean) * lax.rsqrt(var + _EPS) + be, 0.0)

    h = bn_relu(x @ w1 + b1, g1, be1)
    h = bn_relu(h @ w2 + b2, g2, be2)
    h = bn_relu(h @ w3 + b3, g3, be3)
    return jnp.tanh(h @ w4 + b4)


def reference_forward_mixed(x, params):
    """Mirrors the kernel's exact math in plain JAX (bf16 MXU operands, f32
    accumulation, dead pre-BN biases dropped, folded BN affine, clamped
    single-pass variance)."""
    (w1, b1, g1, be1, w2, b2, g2, be2, w3, b3, g3, be3, w4, b4) = params

    def mm(h, w):
        return jnp.dot(h.astype(jnp.bfloat16), w.astype(jnp.bfloat16),
                       preferred_element_type=jnp.float32)

    def bn_relu(h, g, be):
        mean = jnp.mean(h, axis=0, keepdims=True)
        var = jnp.maximum(jnp.mean(h * h, axis=0, keepdims=True)
                          - mean * mean, 0.0)
        scale = g * lax.rsqrt(var + _EPS)
        shift = be - mean * scale
        return jnp.maximum(h * scale + shift, 0.0)

    h = bn_relu(mm(x, w1), g1, be1)
    h = bn_relu(mm(h, w2), g2, be2)
    h = bn_relu(mm(h, w3), g3, be3)
    return jnp.tanh(mm(h, w4) + b4)


if __name__ == "__main__":
    B = 8
    noise_dim = 32
    output_dim = 64

    key = jax.random.PRNGKey(0)
    kx, kp = jax.random.split(key)
    x = jax.random.normal(kx, (B, noise_dim), jnp.float32)
    params = init_params(kp, noise_dim, output_dim)

    prep, out_dim = prepare_params(params)          # one-time bf16 cast / pad
    out = jax.block_until_ready(generator_forward(x, prep, out_dim=out_dim))
    assert out.shape == (B, output_dim)

    ref_mixed = reference_forward_mixed(x, params)
    ref_f32 = reference_forward_f32(x, params)

    err_mixed = float(jnp.max(jnp.abs(out - ref_mixed)))
    err_f32 = float(jnp.max(jnp.abs(out - ref_f32)))
    # Kernel must match its own-precision reference tightly; the f32 PyTorch
    # reference is matched within bf16-weight quantization error.
    assert err_mixed < 1e-3, f"kernel vs mixed-precision ref: {err_mixed}"
    assert err_f32 < 5e-2, f"kernel vs f32 PyTorch-semantics ref: {err_f32}"
    print("KERNEL_OK")
</pallas_src>

<mosaic_0001>
module attributes {stable_mosaic.version = 11 : i64} {
  func.func @_generator_kernel(%arg0: memref<8x32xf32, #tpu.memory_space<vmem>>, %arg1: memref<32x256xbf16, #tpu.memory_space<vmem>>, %arg2: memref<1x256xf32, #tpu.memory_space<vmem>>, %arg3: memref<1x256xf32, #tpu.memory_space<vmem>>, %arg4: memref<256x512xbf16, #tpu.memory_space<vmem>>, %arg5: memref<1x512xf32, #tpu.memory_space<vmem>>, %arg6: memref<1x512xf32, #tpu.memory_space<vmem>>, %arg7: memref<512x1024xbf16, #tpu.memory_space<any>>, %arg8: memref<1x1024xf32, #tpu.memory_space<vmem>>, %arg9: memref<1x1024xf32, #tpu.memory_space<vmem>>, %arg10: memref<1024x128xbf16, #tpu.memory_space<any>>, %arg11: memref<1x128xf32, #tpu.memory_space<vmem>>, %arg12: memref<8x128xf32, #tpu.memory_space<vmem>>, %arg13: memref<512x1024xbf16, #tpu.memory_space<vmem>>, %arg14: memref<1024x128xbf16, #tpu.memory_space<vmem>>, %arg15: memref<2x!tpu.dma_semaphore, #tpu.memory_space<semaphore_mem>>) attributes {dimension_semantics = [], scalar_prefetch = 0 : i64, scratch_operands = 3 : i64, tpu.core_type = #tpu.core_type<tc>} {
    %c0_i32 = arith.constant 0 : i32
    %0 = tpu.memref_slice %arg15[%c0_i32] : memref<2x!tpu.dma_semaphore, #tpu.memory_space<semaphore_mem>> -> memref<1x!tpu.dma_semaphore, #tpu.memory_space<semaphore_mem>>
    %1 = tpu.memref_squeeze %0 : memref<1x!tpu.dma_semaphore, #tpu.memory_space<semaphore_mem>> -> memref<!tpu.dma_semaphore, #tpu.memory_space<semaphore_mem>>
    tpu.enqueue_dma source(%arg7 : memref<512x1024xbf16, #tpu.memory_space<any>>) target(%arg13 : memref<512x1024xbf16, #tpu.memory_space<vmem>>) target_semaphore(%1 : memref<!tpu.dma_semaphore, #tpu.memory_space<semaphore_mem>>)
    %c1_i32 = arith.constant 1 : i32
    %2 = tpu.memref_slice %arg15[%c1_i32] : memref<2x!tpu.dma_semaphore, #tpu.memory_space<semaphore_mem>> -> memref<1x!tpu.dma_semaphore, #tpu.memory_space<semaphore_mem>>
    %3 = tpu.memref_squeeze %2 : memref<1x!tpu.dma_semaphore, #tpu.memory_space<semaphore_mem>> -> memref<!tpu.dma_semaphore, #tpu.memory_space<semaphore_mem>>
    tpu.enqueue_dma source(%arg10 : memref<1024x128xbf16, #tpu.memory_space<any>>) target(%arg14 : memref<1024x128xbf16, #tpu.memory_space<vmem>>) target_semaphore(%3 : memref<!tpu.dma_semaphore, #tpu.memory_space<semaphore_mem>>)
    %c0 = arith.constant 0 : index
    %c0_0 = arith.constant 0 : index
    %4 = vector.load %arg0[%c0, %c0_0] : memref<8x32xf32, #tpu.memory_space<vmem>>, vector<8x32xf32>
    %c0_1 = arith.constant 0 : index
    %c0_2 = arith.constant 0 : index
    %5 = vector.load %arg1[%c0_1, %c0_2] : memref<32x256xbf16, #tpu.memory_space<vmem>>, vector<32x256xbf16>
    %6 = arith.truncf %4 : vector<8x32xf32> to vector<8x32xbf16>
    %cst = arith.constant dense<0.000000e+00> : vector<8x256xf32>
    %7 = tpu.matmul %6, %5, %cst {dimension_numbers = #tpu.dot_dimension_numbers<[1], [0], [0], [1], [0, 0, 1, 1], [], []>} : vector<8x32xbf16>, vector<32x256xbf16>, vector<8x256xf32> -> vector<8x256xf32>
    %cst_3 = arith.constant dense<0.000000e+00> : vector<256xf32>
    %8 = vector.multi_reduction <add>, %7, %cst_3 [0] : vector<8x256xf32> to vector<256xf32>
    %9 = vector.shape_cast %8 : vector<256xf32> to vector<1x256xf32>
    %cst_4 = arith.constant 8.000000e+00 : f32
    %10 = vector.broadcast %cst_4 : f32 to vector<1x256xf32>
    %11 = arith.divf %9, %10 : vector<1x256xf32>
    %12 = arith.mulf %7, %7 : vector<8x256xf32>
    %cst_5 = arith.constant dense<0.000000e+00> : vector<256xf32>
    %13 = vector.multi_reduction <add>, %12, %cst_5 [0] : vector<8x256xf32> to vector<256xf32>
    %14 = vector.shape_cast %13 : vector<256xf32> to vector<1x256xf32>
    %cst_6 = arith.constant 8.000000e+00 : f32
    %15 = vector.broadcast %cst_6 : f32 to vector<1x256xf32>
    %16 = arith.divf %14, %15 : vector<1x256xf32>
    %17 = arith.mulf %11, %11 : vector<1x256xf32>
    %18 = arith.subf %16, %17 : vector<1x256xf32>
    %cst_7 = arith.constant 0.000000e+00 : f32
    %19 = vector.broadcast %cst_7 : f32 to vector<1x256xf32>
    %20 = arith.maximumf %18, %19 : vector<1x256xf32>
    %c0_8 = arith.constant 0 : index
    %c0_9 = arith.constant 0 : index
    %21 = vector.load %arg2[%c0_8, %c0_9] : memref<1x256xf32, #tpu.memory_space<vmem>>, vector<1x256xf32>
    %cst_10 = arith.constant 9.99999974E-6 : f32
    %22 = vector.broadcast %cst_10 : f32 to vector<1x256xf32>
    %23 = arith.addf %20, %22 : vector<1x256xf32>
    %24 = math.rsqrt %23 : vector<1x256xf32>
    %25 = arith.mulf %21, %24 : vector<1x256xf32>
    %c0_11 = arith.constant 0 : index
    %c0_12 = arith.constant 0 : index
    %26 = vector.load %arg3[%c0_11, %c0_12] : memref<1x256xf32, #tpu.memory_space<vmem>>, vector<1x256xf32>
    %27 = arith.mulf %11, %25 : vector<1x256xf32>
    %28 = arith.subf %26, %27 : vector<1x256xf32>
    %29 = vector.broadcast %25 : vector<1x256xf32> to vector<8x256xf32>
    %30 = arith.mulf %7, %29 : vector<8x256xf32>
    %31 = vector.broadcast %28 : vector<1x256xf32> to vector<8x256xf32>
    %32 = arith.addf %30, %31 : vector<8x256xf32>
    %cst_13 = arith.constant 0.000000e+00 : f32
    %33 = vector.broadcast %cst_13 : f32 to vector<8x256xf32>
    %34 = arith.maximumf %32, %33 : vector<8x256xf32>
    %c0_14 = arith.constant 0 : index
    %c0_15 = arith.constant 0 : index
    %35 = vector.load %arg4[%c0_14, %c0_15] : memref<256x512xbf16, #tpu.memory_space<vmem>>, vector<256x512xbf16>
    %36 = arith.truncf %34 : vector<8x256xf32> to vector<8x256xbf16>
    %cst_16 = arith.constant dense<0.000000e+00> : vector<8x512xf32>
    %37 = tpu.matmul %36, %35, %cst_16 {dimension_numbers = #tpu.dot_dimension_numbers<[1], [0], [0], [1], [0, 0, 1, 1], [], []>} : vector<8x256xbf16>, vector<256x512xbf16>, vector<8x512xf32> -> vector<8x512xf32>
    %cst_17 = arith.constant dense<0.000000e+00> : vector<512xf32>
    %38 = vector.multi_reduction <add>, %37, %cst_17 [0] : vector<8x512xf32> to vector<512xf32>
    %39 = vector.shape_cast %38 : vector<512xf32> to vector<1x512xf32>
    %cst_18 = arith.constant 8.000000e+00 : f32
    %40 = vector.broadcast %cst_18 : f32 to vector<1x512xf32>
    %41 = arith.divf %39, %40 : vector<1x512xf32>
    %42 = arith.mulf %37, %37 : vector<8x512xf32>
    %cst_19 = arith.constant dense<0.000000e+00> : vector<512xf32>
    %43 = vector.multi_reduction <add>, %42, %cst_19 [0] : vector<8x512xf32> to vector<512xf32>
    %44 = vector.shape_cast %43 : vector<512xf32> to vector<1x512xf32>
    %cst_20 = arith.constant 8.000000e+00 : f32
    %45 = vector.broadcast %cst_20 : f32 to vector<1x512xf32>
    %46 = arith.divf %44, %45 : vector<1x512xf32>
    %47 = arith.mulf %41, %41 : vector<1x512xf32>
    %48 = arith.subf %46, %47 : vector<1x512xf32>
    %cst_21 = arith.constant 0.000000e+00 : f32
    %49 = vector.broadcast %cst_21 : f32 to vector<1x512xf32>
    %50 = arith.maximumf %48, %49 : vector<1x512xf32>
    %c0_22 = arith.constant 0 : index
    %c0_23 = arith.constant 0 : index
    %51 = vector.load %arg5[%c0_22, %c0_23] : memref<1x512xf32, #tpu.memory_space<vmem>>, vector<1x512xf32>
    %cst_24 = arith.constant 9.99999974E-6 : f32
    %52 = vector.broadcast %cst_24 : f32 to vector<1x512xf32>
    %53 = arith.addf %50, %52 : vector<1x512xf32>
    %54 = math.rsqrt %53 : vector<1x512xf32>
    %55 = arith.mulf %51, %54 : vector<1x512xf32>
    %c0_25 = arith.constant 0 : index
    %c0_26 = arith.constant 0 : index
    %56 = vector.load %arg6[%c0_25, %c0_26] : memref<1x512xf32, #tpu.memory_space<vmem>>, vector<1x512xf32>
    %57 = arith.mulf %41, %55 : vector<1x512xf32>
    %58 = arith.subf %56, %57 : vector<1x512xf32>
    %59 = vector.broadcast %55 : vector<1x512xf32> to vector<8x512xf32>
    %60 = arith.mulf %37, %59 : vector<8x512xf32>
    %61 = vector.broadcast %58 : vector<1x512xf32> to vector<8x512xf32>
    %62 = arith.addf %60, %61 : vector<8x512xf32>
    %cst_27 = arith.constant 0.000000e+00 : f32
    %63 = vector.broadcast %cst_27 : f32 to vector<8x512xf32>
    %64 = arith.maximumf %62, %63 : vector<8x512xf32>
    %c0_i32_28 = arith.constant 0 : i32
    %65 = tpu.memref_slice %arg15[%c0_i32_28] : memref<2x!tpu.dma_semaphore, #tpu.memory_space<semaphore_mem>> -> memref<1x!tpu.dma_semaphore, #tpu.memory_space<semaphore_mem>>
    %66 = tpu.memref_squeeze %65 : memref<1x!tpu.dma_semaphore, #tpu.memory_space<semaphore_mem>> -> memref<!tpu.dma_semaphore, #tpu.memory_space<semaphore_mem>>
    tpu.wait_dma2 semaphore(%66 : memref<!tpu.dma_semaphore, #tpu.memory_space<semaphore_mem>>) src(%arg7 : memref<512x1024xbf16, #tpu.memory_space<any>>) dst(%arg13 : memref<512x1024xbf16, #tpu.memory_space<vmem>>)
    %c0_29 = arith.constant 0 : index
    %c0_30 = arith.constant 0 : index
    %67 = vector.load %arg13[%c0_29, %c0_30] : memref<512x1024xbf16, #tpu.memory_space<vmem>>, vector<512x1024xbf16>
    %68 = arith.truncf %64 : vector<8x512xf32> to vector<8x512xbf16>
    %cst_31 = arith.constant dense<0.000000e+00> : vector<8x1024xf32>
    %69 = tpu.matmul %68, %67, %cst_31 {dimension_numbers = #tpu.dot_dimension_numbers<[1], [0], [0], [1], [0, 0, 1, 1], [], []>} : vector<8x512xbf16>, vector<512x1024xbf16>, vector<8x1024xf32> -> vector<8x1024xf32>
    %cst_32 = arith.constant dense<0.000000e+00> : vector<1024xf32>
    %70 = vector.multi_reduction <add>, %69, %cst_32 [0] : vector<8x1024xf32> to vector<1024xf32>
    %71 = vector.shape_cast %70 : vector<1024xf32> to vector<1x1024xf32>
    %cst_33 = arith.constant 8.000000e+00 : f32
    %72 = vector.broadcast %cst_33 : f32 to vector<1x1024xf32>
    %73 = arith.divf %71, %72 : vector<1x1024xf32>
    %74 = arith.mulf %69, %69 : vector<8x1024xf32>
    %cst_34 = arith.constant dense<0.000000e+00> : vector<1024xf32>
    %75 = vector.multi_reduction <add>, %74, %cst_34 [0] : vector<8x1024xf32> to vector<1024xf32>
    %76 = vector.shape_cast %75 : vector<1024xf32> to vector<1x1024xf32>
    %cst_35 = arith.constant 8.000000e+00 : f32
    %77 = vector.broadcast %cst_35 : f32 to vector<1x1024xf32>
    %78 = arith.divf %76, %77 : vector<1x1024xf32>
    %79 = arith.mulf %73, %73 : vector<1x1024xf32>
    %80 = arith.subf %78, %79 : vector<1x1024xf32>
    %cst_36 = arith.constant 0.000000e+00 : f32
    %81 = vector.broadcast %cst_36 : f32 to vector<1x1024xf32>
    %82 = arith.maximumf %80, %81 : vector<1x1024xf32>
    %c0_37 = arith.constant 0 : index
    %c0_38 = arith.constant 0 : index
    %83 = vector.load %arg8[%c0_37, %c0_38] : memref<1x1024xf32, #tpu.memory_space<vmem>>, vector<1x1024xf32>
    %cst_39 = arith.constant 9.99999974E-6 : f32
    %84 = vector.broadcast %cst_39 : f32 to vector<1x1024xf32>
    %85 = arith.addf %82, %84 : vector<1x1024xf32>
    %86 = math.rsqrt %85 : vector<1x1024xf32>
    %87 = arith.mulf %83, %86 : vector<1x1024xf32>
    %c0_40 = arith.constant 0 : index
    %c0_41 = arith.constant 0 : index
    %88 = vector.load %arg9[%c0_40, %c0_41] : memref<1x1024xf32, #tpu.memory_space<vmem>>, vector<1x1024xf32>
    %89 = arith.mulf %73, %87 : vector<1x1024xf32>
    %90 = arith.subf %88, %89 : vector<1x1024xf32>
    %91 = vector.broadcast %87 : vector<1x1024xf32> to vector<8x1024xf32>
    %92 = arith.mulf %69, %91 : vector<8x1024xf32>
    %93 = vector.broadcast %90 : vector<1x1024xf32> to vector<8x1024xf32>
    %94 = arith.addf %92, %93 : vector<8x1024xf32>
    %cst_42 = arith.constant 0.000000e+00 : f32
    %95 = vector.broadcast %cst_42 : f32 to vector<8x1024xf32>
    %96 = arith.maximumf %94, %95 : vector<8x1024xf32>
    %c1_i32_43 = arith.constant 1 : i32
    %97 = tpu.memref_slice %arg15[%c1_i32_43] : memref<2x!tpu.dma_semaphore, #tpu.memory_space<semaphore_mem>> -> memref<1x!tpu.dma_semaphore, #tpu.memory_space<semaphore_mem>>
    %98 = tpu.memref_squeeze %97 : memref<1x!tpu.dma_semaphore, #tpu.memory_space<semaphore_mem>> -> memref<!tpu.dma_semaphore, #tpu.memory_space<semaphore_mem>>
    tpu.wait_dma2 semaphore(%98 : memref<!tpu.dma_semaphore, #tpu.memory_space<semaphore_mem>>) src(%arg10 : memref<1024x128xbf16, #tpu.memory_space<any>>) dst(%arg14 : memref<1024x128xbf16, #tpu.memory_space<vmem>>)
    %c0_44 = arith.constant 0 : index
    %c0_45 = arith.constant 0 : index
    %99 = vector.load %arg14[%c0_44, %c0_45] : memref<1024x128xbf16, #tpu.memory_space<vmem>>, vector<1024x128xbf16>
    %100 = arith.truncf %96 : vector<8x1024xf32> to vector<8x1024xbf16>
    %cst_46 = arith.constant dense<0.000000e+00> : vector<8x128xf32>
    %101 = tpu.matmul %100, %99, %cst_46 {dimension_numbers = #tpu.dot_dimension_numbers<[1], [0], [0], [1], [0, 0, 1, 1], [], []>} : vector<8x1024xbf16>, vector<1024x128xbf16>, vector<8x128xf32> -> vector<8x128xf32>
    %c0_47 = arith.constant 0 : index
    %c0_48 = arith.constant 0 : index
    %102 = vector.load %arg11[%c0_47, %c0_48] : memref<1x128xf32, #tpu.memory_space<vmem>>, vector<1x128xf32>
    %103 = vector.broadcast %102 : vector<1x128xf32> to vector<8x128xf32>
    %104 = arith.addf %101, %103 : vector<8x128xf32>
    %105 = math.tanh %104 : vector<8x128xf32>
    %c0_49 = arith.constant 0 : index
    %c0_50 = arith.constant 0 : index
    %106 = vector.load %arg12[%c0_49, %c0_50] : memref<8x128xf32, #tpu.memory_space<vmem>>, vector<8x128xf32>
    tpu.vector_store %arg12[%c0_49, %c0_50], %105 {strides = array<i32>} : memref<8x128xf32, #tpu.memory_space<vmem>>, vector<8x128xf32>,
    return
  }
}

</mosaic_0001>

<llo_original>
// kernel: generator_forward.1
$region0: #{generator_forward.1}
  #allocation0 [shape = 'u32[]', space=smem, size = 0x4, offset = 0x4, fixed_abs, tag = 'smem constant byte address 0x4 - core index']
  #allocation1 [shape = 'u32[144,128]{1,0:T(1,128)}', space=vmem, size = 0x12000, scoped, tag = 'internal scratch']
  #allocation2 [shape = 'bf16[512,1024]{1,0:T(16,128)(2,1)}', space=vmem, size = 0x100000, scoped, tag = 'scratch operand']
  #allocation3 [shape = 'bf16[1024,128]{1,0:T(16,128)(2,1)}', space=vmem, size = 0x40000, scoped, tag = 'scratch operand']
  #allocation4 [shape = 's32[2]{0}', space=sflag, size = 0x8, scoped, tag = 'scratch operand']
  #allocation15 [shape = 's32[]', space=sflag, size = 0x4, offset = 0, fixed_abs, tag = 'sflag constant byte address 0x0 - dummy sync flag']
  #allocation17 [shape = 's32[]', space=sflag, size = 0x4, offset = 0, fixed_abs, tag = 'sflag constant byte address 0x0 - dummy sync flag']
  #allocation18 [shape = 's32[]', space=sflag, size = 0x4, offset = 0, fixed_abs, tag = 'sflag constant byte address 0x0 - dummy sync flag']
  #allocation19 [shape = 'u32[]', space=smem, size = 0x4, offset = 0x44, fixed_abs, tag = 'smem constant byte address 0x44 - assertion arg 0']
  #allocation20 [shape = 'u32[]', space=smem, size = 0x4, offset = 0x48, fixed_abs, tag = 'smem constant byte address 0x48 - assertion arg 1']
  %s0 = inlined_call_operand.hbm [shape: f32[8,32], index: 0, kind: input, shape index: {}]
  %s1 = inlined_call_operand.hbm [shape: bf16[32,256], index: 1, kind: input, shape index: {}]
  %s2 = inlined_call_operand.vmem [shape: f32[1,256], index: 2, kind: input, shape index: {}]
  %s3 = inlined_call_operand.hbm [shape: f32[1,256], index: 3, kind: input, shape index: {}]
  %s4 = inlined_call_operand.hbm [shape: bf16[256,512], index: 4, kind: input, shape index: {}]
  %s5 = inlined_call_operand.hbm [shape: f32[1,512], index: 5, kind: input, shape index: {}]
  %s6 = inlined_call_operand.vmem [shape: f32[1,512], index: 6, kind: input, shape index: {}]
  %s7 = inlined_call_operand.hbm [shape: bf16[512,1024], index: 7, kind: input, shape index: {}]
  %s8 = inlined_call_operand.vmem [shape: f32[1,1024], index: 8, kind: input, shape index: {}]
  %s9 = inlined_call_operand.vmem [shape: f32[1,1024], index: 9, kind: input, shape index: {}]
  %s10 = inlined_call_operand.hbm [shape: bf16[1024,128], index: 10, kind: input, shape index: {}]
  %s11 = inlined_call_operand.vmem [shape: f32[1,128], index: 11, kind: input, shape index: {}]
  %s12 = inlined_call_operand.hbm [shape: f32[8,128], index: 12, kind: output, shape index: {}]
  %s13 = sld [smem:[#allocation0]]
  $region74: #{generator_forward.1} parent=0
    _
  %s15 = ssub.s32 1, %s13
  %s16 = scalar_select 0, %s15, %s13
  $region1: #{generator_forward.1} parent=0
    #allocation5 [shape = 'u8[4096]{0}', space=vmem, size = 0x1000, scoped, tag = 'input window, operand 0, single buffered']
    #allocation6 [shape = 's32[1]{0}', space=sflag, size = 0x4, scoped, tag = 'scoped memory for generator_forward.1']
    #allocation7 [shape = 's32[1]{0}', space=sflag, size = 0x4, scoped, tag = 'scoped memory for generator_forward.1']
    #allocation8 [shape = 'u8[16384]{0}', space=vmem, size = 0x4000, scoped, tag = 'input window, operand 1, single buffered']
    #allocation9 [shape = 's32[1]{0}', space=sflag, size = 0x4, scoped, tag = 'scoped memory for generator_forward.1']
    #allocation10 [shape = 'u8[1024]{0}', space=vmem, size = 0x400, scoped, tag = 'input window, operand 3, single buffered']
    #allocation11 [shape = 'u8[262144]{0}', space=vmem, size = 0x40000, scoped, tag = 'input window, operand 4, single buffered']
    #allocation12 [shape = 's32[1]{0}', space=sflag, size = 0x4, scoped, tag = 'scoped memory for generator_forward.1']
    #allocation13 [shape = 'u8[2048]{0}', space=vmem, size = 0x800, scoped, tag = 'input window, operand 5, single buffered']
    #allocation14 [shape = 'u8[4096]{0}', space=vmem, size = 0x1000, scoped, tag = 'output window, operand 0, single buffered']
    #allocation16 [shape = 'u32[9]{0}', space=smem, size = 0x24, scoped, tag = 'DMA stride descriptor']
    %17 = vsyncpa [#allocation6], 0
    %18 = vsyncpa [#allocation9], 0
    %19 = vsyncpa [#allocation12], 0
    %20 = vsyncpa [#allocation7], 0
    // Predicated region
    $region2: #{generator_forward.1} parent=1 // pred_check
      _
    $region3: #{generator_forward.1} parent=1 // pred_check_branch
      %22 = sbr.rel (0) target = $region5
    $region4: #{generator_forward.1} parent=1 // pred_region
      %s24 = ssub.s32 128, 128
      %25 = vsyncadd [#allocation6], %s24
      %s27 = sshll.u32 [#allocation5], 4
      %s28 = int_to_ptr.vmem [resolvable:$true] %s27
      %30 = dma.hbm_to_vmem [thread:$0]  %s0, 128, %s28, [#allocation6]
    $region5: #{generator_forward.1} parent=1 // pred_fallthru
      _
    // Predicated region
    $region6: #{generator_forward.1} parent=1 // pred_check
      _
    $region7: #{generator_forward.1} parent=1 // pred_check_branch
      %32 = sbr.rel (0) target = $region9
    $region8: #{generator_forward.1} parent=1 // pred_region
      %s34 = ssub.s32 512, 512
      %35 = vsyncadd [#allocation9], %s34
      %s36 = sshll.u32 [#allocation8], 4
      %s37 = int_to_ptr.vmem [resolvable:$true] %s36
      %42 = dma.hbm_to_vmem [thread:$0]  %s1, 512, %s37, [#allocation9], 128, 128, 8
    $region9: #{generator_forward.1} parent=1 // pred_fallthru
      _
    // Predicated region
    $region10: #{generator_forward.1} parent=1 // pred_check
      _
    $region11: #{generator_forward.1} parent=1 // pred_check_branch
      %44 = sbr.rel (0) target = $region13
    $region12: #{generator_forward.1} parent=1 // pred_region
      _
    $region13: #{generator_forward.1} parent=1 // pred_fallthru
      _
    // Predicated region
    $region14: #{generator_forward.1} parent=1 // pred_check
      _
    $region15: #{generator_forward.1} parent=1 // pred_check_branch
      %46 = sbr.rel (0) target = $region17
    $region16: #{generator_forward.1} parent=1 // pred_region
      %s48 = ssub.s32 32, 32
      %49 = vsyncadd [#allocation9], %s48
      %s51 = sshll.u32 [#allocation10], 4
      %s52 = int_to_ptr.vmem [resolvable:$true] %s51
      %54 = dma.hbm_to_vmem [thread:$0]  %s3, 32, %s52, [#allocation9]
    $region17: #{generator_forward.1} parent=1 // pred_fallthru
      _
    // Predicated region
    $region18: #{generator_forward.1} parent=1 // pred_check
      _
    $region19: #{generator_forward.1} parent=1 // pred_check_branch
      %56 = sbr.rel (0) target = $region21
    $region20: #{generator_forward.1} parent=1 // pred_region
      %s58 = ssub.s32 8192, 8192
      %59 = vsyncadd [#allocation12], %s58
      %s60 = sshll.u32 [#allocation11], 4
      %s61 = int_to_ptr.vmem [resolvable:$true] %s60
      %66 = dma.hbm_to_vmem [thread:$0]  %s4, 8192, %s61, [#allocation12], 256, 256, 16
    $region21: #{generator_forward.1} parent=1 // pred_fallthru
      _
    // Predicated region
    $region22: #{generator_forward.1} parent=1 // pred_check
      _
    $region23: #{generator_forward.1} parent=1 // pred_check_branch
      %68 = sbr.rel (0) target = $region25
    $region24: #{generator_forward.1} parent=1 // pred_region
      %s70 = ssub.s32 64, 64
      %71 = vsyncadd [#allocation12], %s70
      %s73 = sshll.u32 [#allocation13], 4
      %s74 = int_to_ptr.vmem [resolvable:$true] %s73
      %76 = dma.hbm_to_vmem [thread:$0]  %s5, 64, %s74, [#allocation12]
    $region25: #{generator_forward.1} parent=1 // pred_fallthru
      _
    // Predicated region
    $region26: #{generator_forward.1} parent=1 // pred_check
      _
    $region27: #{generator_forward.1} parent=1 // pred_check_branch
      %78 = sbr.rel (0) target = $region29
    $region28: #{generator_forward.1} parent=1 // pred_region
      _
    $region29: #{generator_forward.1} parent=1 // pred_fallthru
      _
    // Predicated region
    $region30: #{generator_forward.1} parent=1 // pred_check
      _
    $region31: #{generator_forward.1} parent=1 // pred_check_branch
      %80 = sbr.rel (0) target = $region33
    $region32: #{generator_forward.1} parent=1 // pred_region
      _
    $region33: #{generator_forward.1} parent=1 // pred_fallthru
      _
    // Predicated region
    $region34: #{generator_forward.1} parent=1 // pred_check
      _
    $region35: #{generator_forward.1} parent=1 // pred_check_branch
      %82 = sbr.rel (0) target = $region37
    $region36: #{generator_forward.1} parent=1 // pred_region
      _
    $region37: #{generator_forward.1} parent=1 // pred_fallthru
      _
    // Predicated region
    $region38: #{generator_forward.1} parent=1 // pred_check
      _
    $region39: #{generator_forward.1} parent=1 // pred_check_branch
      %84 = sbr.rel (0) target = $region41
    $region40: #{generator_forward.1} parent=1 // pred_region
      _
    $region41: #{generator_forward.1} parent=1 // pred_fallthru
      _
    // Predicated region
    $region42: #{generator_forward.1} parent=1 // pred_check
      _
    $region43: #{generator_forward.1} parent=1 // pred_check_branch
      %86 = sbr.rel (0) target = $region45
    $region44: #{generator_forward.1} parent=1 // pred_region
      %87 = dma.done [#allocation6], 128
    $region45: #{generator_forward.1} parent=1 // pred_fallthru
      _
    // Predicated region
    $region46: #{generator_forward.1} parent=1 // pred_check
      _
    $region47: #{generator_forward.1} parent=1 // pred_check_branch
      %89 = sbr.rel (0) target = $region49
    $region48: #{generator_forward.1} parent=1 // pred_region
      %90 = dma.done [#allocation9], 512
    $region49: #{generator_forward.1} parent=1 // pred_fallthru
      _
    // Predicated region
    $region50: #{generator_forward.1} parent=1 // pred_check
      _
    $region51: #{generator_forward.1} parent=1 // pred_check_branch
      %92 = sbr.rel (0) target = $region53
    $region52: #{generator_forward.1} parent=1 // pred_region
      %93 = dma.done [#allocation9], 32
    $region53: #{generator_forward.1} parent=1 // pred_fallthru
      _
    // Predicated region
    $region54: #{generator_forward.1} parent=1 // pred_check
      _
    $region55: #{generator_forward.1} parent=1 // pred_check_branch
      %95 = sbr.rel (0) target = $region57
    $region56: #{generator_forward.1} parent=1 // pred_region
      %96 = dma.done [#allocation12], 8192
    $region57: #{generator_forward.1} parent=1 // pred_fallthru
      _
    // Predicated region
    $region58: #{generator_forward.1} parent=1 // pred_check
      _
    $region59: #{generator_forward.1} parent=1 // pred_check_branch
      %98 = sbr.rel (0) target = $region61
    $region60: #{generator_forward.1} parent=1 // pred_region
      %99 = dma.done [#allocation12], 64
    $region61: #{generator_forward.1} parent=1 // pred_fallthru
      _
    %s102 = sshll.u32 1, 14
    %s103 = sxor.u32 4294967295, %s102
    %s105 = sld [smem:[#allocation0]]
    %s106 = sadd.s32 2, %s105
    %s108 = sshll.u32 7, 26
    %s109 = sxor.u32 4294967295, %s108
    %s110 = sand.u32 0, %s109
    %s111 = sshll.u32 %s106, 26
    %s112 = sor.u32 %s110, %s111
    %s113 = sshll.u32 [#allocation2], 4
    %s114 = int_to_ptr.vmem [resolvable:$true] %s113
    %117 = sst [smem:[#allocation16]] 1024
    %s118 = scalar_lea.smem [#allocation16], 1
    %119 = sst [smem:[%s118]] 1024
    %s120 = scalar_lea.smem [#allocation16], 2
    %121 = sst [smem:[%s120]] 8
    %s122 = scalar_lea.smem [#allocation16], 3
    %123 = sst [smem:[%s122]] 64
    %s124 = scalar_lea.smem [#allocation16], 4
    %125 = sst [smem:[%s124]] 128
    %s126 = scalar_lea.smem [#allocation16], 5
    %127 = sst [smem:[%s126]] 2
    %s128 = scalar_lea.smem [#allocation16], 6
    %129 = sst [smem:[%s128]] 512
    %s130 = scalar_lea.smem [#allocation16], 7
    %131 = sst [smem:[%s130]] 64
    %s132 = scalar_lea.smem [#allocation16], 8
    %133 = sst [smem:[%s132]] 4
    %135 = dma.general %s7, 32768, %s114, [#allocation4], [#allocation15], [#allocation16], %s112, 0
    %s136 = scalar_lea.sflag [#allocation4], 1
    // Predicated region
    $region62: #{generator_forward.1} parent=1 // pred_check
      _
    $region63: #{generator_forward.1} parent=1 // pred_check_branch
      %138 = sbr.rel target = $region65
    $region64: #{generator_forward.1} parent=1 // pred_region
      %139 = sst [smem:[#allocation19]] [#allocation18]
      %140 = sst [smem:[#allocation20]] [#allocation17]
    $region65: #{generator_forward.1} parent=1 // pred_fallthru
      _
    %142 = shalt.err (0)
    %s144 = sshll.u32 [#allocation3], 4
    %s145 = int_to_ptr.vmem [resolvable:$true] %s144
    %147 = dma.hbm_to_vmem [thread:$0]  %s10, 8192, %s145, %s136
    %v148 = vld [vmem:[#allocation5] sm:$0xff]
    %v149 = vld [vmem:[#allocation8] sm:$0xff]
    %v150 = vld [vmem:[#allocation8 + $0x8] sm:$0xff]
    %v151 = vld [vmem:[#allocation8 + $0x10] sm:$0xff]
    %v152 = vld [vmem:[#allocation8 + $0x18] sm:$0xff]
    %v153 = vpack.c.bf16 %v148, %v148
    %v158 = vunpack.c.l.b16 %v149
    %v159 = vunpack.c.h.b16 %v149
    %v160 = vunpack.c.l.b16 %v150
    %v161 = vunpack.c.h.b16 %v150
    %v162 = vunpack.c.l.b16 %v151
    %v163 = vunpack.c.h.b16 %v151
    %v164 = vunpack.c.l.b16 %v152
    %v165 = vunpack.c.h.b16 %v152
    %v166 = vpack.c.b16 %v160, %v158
    %v167 = vpack.c.b16 %v161, %v159
    %v168 = vpack.c.b16 %v164, %v162
    %v169 = vpack.c.b16 %v165, %v163
    %vm174 = vcmask 261120
    %v176 = vsel %vm174, %v153, 0
    %178 = vmatprep.subr.bf16.mxu0 %v167
    %179 = vmatpush1.bf16.msra.mxu0 %v166
    %180 = vmatprep.subr.bf16.mxu0 %v169
    %181 = vmatpush1.bf16.msra.mxu0 %v168
    %182 = vmatprep.subr.bf16.mxu0 0
    %183 = vmatpush1.bf16.msra.mxu0 0
    %184 = vmatprep.subr.bf16.mxu0 0
    %185 = vmatpush1.bf16.msra.mxu0 0
    %186 = vmatprep.subr.bf16.mxu0 0
    %187 = vmatpush1.bf16.msra.mxu0 0
    %188 = vmatprep.subr.bf16.mxu0 0
    %189 = vmatpush1.bf16.msra.mxu0 0
    %190 = vmatprep.subr.bf16.mxu0 0
    %191 = vmatpush1.bf16.msra.mxu0 0
    %192 = vmatprep.subr.bf16.mxu0 0
    %193 = vmatpush1.bf16.msra.mxu0 0
    %194 = vmatprep.subr.bf16.mxu0 0
    %195 = vmatpush1.bf16.msra.mxu0 0
    %196 = vmatprep.subr.bf16.mxu0 0
    %197 = vmatpush1.bf16.msra.mxu0 0
    %198 = vmatprep.subr.bf16.mxu0 0
    %199 = vmatpush1.bf16.msra.mxu0 0
    %200 = vmatprep.subr.bf16.mxu0 0
    %201 = vmatpush1.bf16.msra.mxu0 0
    %202 = vmatprep.subr.bf16.mxu0 0
    %203 = vmatpush1.bf16.msra.mxu0 0
    %204 = vmatprep.subr.bf16.mxu0 0
    %205 = vmatpush1.bf16.msra.mxu0 0
    %206 = vmatprep.subr.bf16.mxu0 0
    %207 = vmatpush1.bf16.msra.mxu0 0
    %208 = vmatprep.subr.bf16.mxu0 0
    %209 = vmatpush1.bf16.msra.mxu0 0
    %210 = vmatprep.mubr.bf16.mxu0 0
    %211 = vmatmul.mubr.bf16.gmra.mrb[0].mxu0 %v176
    %v212 = vpop.f32.mrb[0].mxu0
    %v213 = vadd.f32 0.0, %v212
    %v214 = vpop.f32.mrb[0].mxu0
    %v215 = vadd.f32 0.0, %v214
    %v216 = vpop.f32.mrb[0].mxu0
    %v217 = vpop.f32.mrb[0].mxu0
    %218 = vdwg.mxu0
    %v219 = vrot.slane %v213, 4
    %v220 = vadd.f32 %v213, %v219
    %v221 = vrot.slane %v220, 2
    %v222 = vadd.f32 %v220, %v221
    %v223 = vrot.slane %v222, 1
    %v224 = vadd.f32 %v222, %v223
    %v225 = vrot.slane %v215, 4
    %v226 = vadd.f32 %v215, %v225
    %v227 = vrot.slane %v226, 2
    %v228 = vadd.f32 %v226, %v227
    %v229 = vrot.slane %v228, 1
    %v230 = vadd.f32 %v228, %v229
    %v231 = vrcp.pop 8.0
    %v232 = vmul.f32 %v224, %v231
    %v233 = vmul.f32 %v230, %v231
    %v234 = vmul.f32 %v213, %v213
    %v235 = vmul.f32 %v215, %v215
    %v236 = vrot.slane %v234, 4
    %v237 = vadd.f32 %v234, %v236
    %v238 = vrot.slane %v237, 2
    %v239 = vadd.f32 %v237, %v238
    %v240 = vrot.slane %v239, 1
    %v241 = vadd.f32 %v239, %v240
    %v242 = vrot.slane %v235, 4
    %v243 = vadd.f32 %v235, %v242
    %v244 = vrot.slane %v243, 2
    %v245 = vadd.f32 %v243, %v244
    %v246 = vrot.slane %v245, 1
    %v247 = vadd.f32 %v245, %v246
    %v248 = vmul.f32 %v241, %v231
    %v249 = vmul.f32 %v247, %v231
    %v250 = vmul.f32 %v232, %v232
    %v251 = vmul.f32 %v233, %v233
    %v252 = vsub.f32 %v248, %v250
    %v253 = vsub.f32 %v249, %v251
    %v254 = vmax.f32 %v252, 0.0
    %v255 = vmax.f32 %v253, 0.0
    %v256 = vld [vmem:[%s2] sm:$0x3]
    %v257 = vadd.f32 %v254, 1e-05
    %v258 = vadd.f32 %v255, 1e-05
    %v259 = vrsqrt.pop %v257
    %v260 = vrsqrt.pop %v258
    %v263 = vcombine.low %v259, %v260
    %v265 = vunpack.c.l.s4 1966171168
    %v266 = vunpack.c.0.s8 %v265
    %v267 = vlaneseq
    %v268 = vshrl.u32 %v267, 7
    %v269 = vsub.s32 %v266, %v268
    %v270 = vrot.slane %v263, %v269
    %v272 = vunpack.c.l.s4 1966171168
    %v273 = vunpack.c.0.s8 %v272
    %v274 = vlaneseq
    %v275 = vshrl.u32 %v274, 7
    %v276 = vsub.s32 %v273, %v275
    %v277 = vrot.slane %v270, %v276
    %v279 = vmul.f32 %v256, %v277
    %v280 = vld [vmem:[#allocation10] sm:$0x3]
    %v282 = vlaneseq
    %v283 = vshrl.u32 %v282, 7
    %v284 = vsub.s32 0, %v283
    %v285 = vrot.slane %v279, %v284
    %v286 = vlaneseq
    %v287 = vshrl.u32 %v286, 7
    %v288 = vsub.s32 1, %v287
    %v289 = vrot.slane %v279, %v288
    %v292 = vmul.f32 %v232, %v285
    %v293 = vmul.f32 %v233, %v289
    %v296 = vcombine.low %v292, %v293
    %v298 = vunpack.c.l.s4 1966171168
    %v299 = vunpack.c.0.s8 %v298
    %v300 = vlaneseq
    %v301 = vshrl.u32 %v300, 7
    %v302 = vsub.s32 %v299, %v301
    %v303 = vrot.slane %v296, %v302
    %v305 = vunpack.c.l.s4 1966171168
    %v306 = vunpack.c.0.s8 %v305
    %v307 = vlaneseq
    %v308 = vshrl.u32 %v307, 7
    %v309 = vsub.s32 %v306, %v308
    %v310 = vrot.slane %v303, %v309
    %v312 = vsub.f32 %v280, %v310
    %v313 = vmul.f32 %v213, %v285
    %v314 = vmul.f32 %v215, %v289
    %v316 = vlaneseq
    %v317 = vshrl.u32 %v316, 7
    %v318 = vsub.s32 0, %v317
    %v319 = vrot.slane %v312, %v318
    %v320 = vlaneseq
    %v321 = vshrl.u32 %v320, 7
    %v322 = vsub.s32 1, %v321
    %v323 = vrot.slane %v312, %v322
    %v326 = vadd.f32 %v313, %v319
    %v327 = vadd.f32 %v314, %v323
    %v328 = vmax.f32 %v326, 0.0
    %v329 = vmax.f32 %v327, 0.0
    %v330 = vld [vmem:[#allocation11] sm:$0xff]
    %v331 = vld [vmem:[#allocation11 + $0x8] sm:$0xff]
    %v332 = vld [vmem:[#allocation11 + $0x10] sm:$0xff]
    %v333 = vld [vmem:[#allocation11 + $0x18] sm:$0xff]
    %v334 = vld [vmem:[#allocation11 + $0x20] sm:$0xff]
    %v335 = vld [vmem:[#allocation11 + $0x28] sm:$0xff]
    %v336 = vld [vmem:[#allocation11 + $0x30] sm:$0xff]
    %v337 = vld [vmem:[#allocation11 + $0x38] sm:$0xff]
    %v338 = vld [vmem:[#allocation11 + $0x40] sm:$0xff]
    %v339 = vld [vmem:[#allocation11 + $0x48] sm:$0xff]
    %v340 = vld [vmem:[#allocation11 + $0x50] sm:$0xff]
    %v341 = vld [vmem:[#allocation11 + $0x58] sm:$0xff]
    %v342 = vld [vmem:[#allocation11 + $0x60] sm:$0xff]
    %v343 = vld [vmem:[#allocation11 + $0x68] sm:$0xff]
    %v344 = vld [vmem:[#allocation11 + $0x70] sm:$0xff]
    %v345 = vld [vmem:[#allocation11 + $0x78] sm:$0xff]
    %v346 = vld [vmem:[#allocation11 + $0x80] sm:$0xff]
    %v347 = vld [vmem:[#allocation11 + $0x88] sm:$0xff]
    %v348 = vld [vmem:[#allocation11 + $0x90] sm:$0xff]
    %v349 = vld [vmem:[#allocation11 + $0x98] sm:$0xff]
    %v350 = vld [vmem:[#allocation11 + $0xa0] sm:$0xff]
    %v351 = vld [vmem:[#allocation11 + $0xa8] sm:$0xff]
    %v352 = vld [vmem:[#allocation11 + $0xb0] sm:$0xff]
    %v353 = vld [vmem:[#allocation11 + $0xb8] sm:$0xff]
    %v354 = vld [vmem:[#allocation11 + $0xc0] sm:$0xff]
    %v355 = vld [vmem:[#allocation11 + $0xc8] sm:$0xff]
    %v356 = vld [vmem:[#allocation11 + $0xd0] sm:$0xff]
    %v357 = vld [vmem:[#allocation11 + $0xd8] sm:$0xff]
    %v358 = vld [vmem:[#allocation11 + $0xe0] sm:$0xff]
    %v359 = vld [vmem:[#allocation11 + $0xe8] sm:$0xff]
    %v360 = vld [vmem:[#allocation11 + $0xf0] sm:$0xff]
    %v361 = vld [vmem:[#allocation11 + $0xf8] sm:$0xff]
    %v362 = vld [vmem:[#allocation11 + $0x100] sm:$0xff]
    %v363 = vld [vmem:[#allocation11 + $0x108] sm:$0xff]
    %v364 = vld [vmem:[#allocation11 + $0x110] sm:$0xff]
    %v365 = vld [vmem:[#allocation11 + $0x118] sm:$0xff]
    %v366 = vld [vmem:[#allocation11 + $0x120] sm:$0xff]
    %v367 = vld [vmem:[#allocation11 + $0x128] sm:$0xff]
    %v368 = vld [vmem:[#allocation11 + $0x130] sm:$0xff]
    %v369 = vld [vmem:[#allocation11 + $0x138] sm:$0xff]
    %v370 = vld [vmem:[#allocation11 + $0x140] sm:$0xff]
    %v371 = vld [vmem:[#allocation11 + $0x148] sm:$0xff]
    %v372 = vld [vmem:[#allocation11 + $0x150] sm:$0xff]
    %v373 = vld [vmem:[#allocation11 + $0x158] sm:$0xff]
    %v374 = vld [vmem:[#allocation11 + $0x160] sm:$0xff]
    %v375 = vld [vmem:[#allocation11 + $0x168] sm:$0xff]
    %v376 = vld [vmem:[#allocation11 + $0x170] sm:$0xff]
    %v377 = vld [vmem:[#allocation11 + $0x178] sm:$0xff]
    %v378 = vld [vmem:[#allocation11 + $0x180] sm:$0xff]
    %v379 = vld [vmem:[#allocation11 + $0x188] sm:$0xff]
    %v380 = vld [vmem:[#allocation11 + $0x190] sm:$0xff]
    %v381 = vld [vmem:[#allocation11 + $0x198] sm:$0xff]
    %v382 = vld [vmem:[#allocation11 + $0x1a0] sm:$0xff]
    %v383 = vld [vmem:[#allocation11 + $0x1a8] sm:$0xff]
    %v384 = vld [vmem:[#allocation11 + $0x1b0] sm:$0xff]
    %v385 = vld [vmem:[#allocation11 + $0x1b8] sm:$0xff]
    %v386 = vld [vmem:[#allocation11 + $0x1c0] sm:$0xff]
    %v387 = vld [vmem:[#allocation11 + $0x1c8] sm:$0xff]
    %v388 = vld [vmem:[#allocation11 + $0x1d0] sm:$0xff]
    %v389 = vld [vmem:[#allocation11 + $0x1d8] sm:$0xff]
    %v390 = vld [vmem:[#allocation11 + $0x1e0] sm:$0xff]
    %v391 = vld [vmem:[#allocation11 + $0x1e8] sm:$0xff]
    %v392 = vld [vmem:[#allocation11 + $0x1f0] sm:$0xff]
    %v393 = vld [vmem:[#allocation11 + $0x1f8] sm:$0xff]
    %v394 = vpack.c.bf16 %v328, %v328
    %v395 = vpack.c.bf16 %v329, %v329
    %v460 = vunpack.c.l.b16 %v330
    %v461 = vunpack.c.h.b16 %v330
    %v462 = vunpack.c.l.b16 %v331
    %v463 = vunpack.c.h.b16 %v331
    %v464 = vunpack.c.l.b16 %v332
    %v465 = vunpack.c.h.b16 %v332
    %v466 = vunpack.c.l.b16 %v333
    %v467 = vunpack.c.h.b16 %v333
    %v468 = vunpack.c.l.b16 %v334
    %v469 = vunpack.c.h.b16 %v334
    %v470 = vunpack.c.l.b16 %v335
    %v471 = vunpack.c.h.b16 %v335
    %v472 = vunpack.c.l.b16 %v336
    %v473 = vunpack.c.h.b16 %v336
    %v474 = vunpack.c.l.b16 %v337
    %v475 = vunpack.c.h.b16 %v337
    %v476 = vunpack.c.l.b16 %v338
    %v477 = vunpack.c.h.b16 %v338
    %v478 = vunpack.c.l.b16 %v339
    %v479 = vunpack.c.h.b16 %v339
    %v480 = vunpack.c.l.b16 %v340
    %v481 = vunpack.c.h.b16 %v340
    %v482 = vunpack.c.l.b16 %v341
    %v483 = vunpack.c.h.b16 %v341
    %v484 = vunpack.c.l.b16 %v342
    %v485 = vunpack.c.h.b16 %v342
    %v486 = vunpack.c.l.b16 %v343
    %v487 = vunpack.c.h.b16 %v343
    %v488 = vunpack.c.l.b16 %v344
    %v489 = vunpack.c.h.b16 %v344
    %v490 = vunpack.c.l.b16 %v345
    %v491 = vunpack.c.h.b16 %v345
    %v492 = vunpack.c.l.b16 %v346
    %v493 = vunpack.c.h.b16 %v346
    %v494 = vunpack.c.l.b16 %v347
    %v495 = vunpack.c.h.b16 %v347
    %v496 = vunpack.c.l.b16 %v348
    %v497 = vunpack.c.h.b16 %v348
    %v498 = vunpack.c.l.b16 %v349
    %v499 = vunpack.c.h.b16 %v349
    %v500 = vunpack.c.l.b16 %v350
    %v501 = vunpack.c.h.b16 %v350
    %v502 = vunpack.c.l.b16 %v351
    %v503 = vunpack.c.h.b16 %v351
    %v504 = vunpack.c.l.b16 %v352
    %v505 = vunpack.c.h.b16 %v352
    %v506 = vunpack.c.l.b16 %v353
    %v507 = vunpack.c.h.b16 %v353
    %v508 = vunpack.c.l.b16 %v354
    %v509 = vunpack.c.h.b16 %v354
    %v510 = vunpack.c.l.b16 %v355
    %v511 = vunpack.c.h.b16 %v355
    %v512 = vunpack.c.l.b16 %v356
    %v513 = vunpack.c.h.b16 %v356
    %v514 = vunpack.c.l.b16 %v357
    %v515 = vunpack.c.h.b16 %v357
    %v516 = vunpack.c.l.b16 %v358
    %v517 = vunpack.c.h.b16 %v358
    %v518 = vunpack.c.l.b16 %v359
    %v519 = vunpack.c.h.b16 %v359
    %v520 = vunpack.c.l.b16 %v360
    %v521 = vunpack.c.h.b16 %v360
    %v522 = vunpack.c.l.b16 %v361
    %v523 = vunpack.c.h.b16 %v361
    %v524 = vunpack.c.l.b16 %v362
    %v525 = vunpack.c.h.b16 %v362
    %v526 = vunpack.c.l.b16 %v363
    %v527 = vunpack.c.h.b16 %v363
    %v528 = vunpack.c.l.b16 %v364
    %v529 = vunpack.c.h.b16 %v364
    %v530 = vunpack.c.l.b16 %v365
    %v531 = vunpack.c.h.b16 %v365
    %v532 = vunpack.c.l.b16 %v366
    %v533 = vunpack.c.h.b16 %v366
    %v534 = vunpack.c.l.b16 %v367
    %v535 = vunpack.c.h.b16 %v367
    %v536 = vunpack.c.l.b16 %v368
    %v537 = vunpack.c.h.b16 %v368
    %v538 = vunpack.c.l.b16 %v369
    %v539 = vunpack.c.h.b16 %v369
    %v540 = vunpack.c.l.b16 %v370
    %v541 = vunpack.c.h.b16 %v370
    %v542 = vunpack.c.l.b16 %v371
    %v543 = vunpack.c.h.b16 %v371
    %v544 = vunpack.c.l.b16 %v372
    %v545 = vunpack.c.h.b16 %v372
    %v546 = vunpack.c.l.b16 %v373
    %v547 = vunpack.c.h.b16 %v373
    %v548 = vunpack.c.l.b16 %v374
    %v549 = vunpack.c.h.b16 %v374
    %v550 = vunpack.c.l.b16 %v375
    %v551 = vunpack.c.h.b16 %v375
    %v552 = vunpack.c.l.b16 %v376
    %v553 = vunpack.c.h.b16 %v376
    %v554 = vunpack.c.l.b16 %v377
    %v555 = vunpack.c.h.b16 %v377
    %v556 = vunpack.c.l.b16 %v378
    %v557 = vunpack.c.h.b16 %v378
    %v558 = vunpack.c.l.b16 %v379
    %v559 = vunpack.c.h.b16 %v379
    %v560 = vunpack.c.l.b16 %v380
    %v561 = vunpack.c.h.b16 %v380
    %v562 = vunpack.c.l.b16 %v381
    %v563 = vunpack.c.h.b16 %v381
    %v564 = vunpack.c.l.b16 %v382
    %v565 = vunpack.c.h.b16 %v382
    %v566 = vunpack.c.l.b16 %v383
    %v567 = vunpack.c.h.b16 %v383
    %v568 = vunpack.c.l.b16 %v384
    %v569 = vunpack.c.h.b16 %v384
    %v570 = vunpack.c.l.b16 %v385
    %v571 = vunpack.c.h.b16 %v385
    %v572 = vunpack.c.l.b16 %v386
    %v573 = vunpack.c.h.b16 %v386
    %v574 = vunpack.c.l.b16 %v387
    %v575 = vunpack.c.h.b16 %v387
    %v576 = vunpack.c.l.b16 %v388
    %v577 = vunpack.c.h.b16 %v388
    %v578 = vunpack.c.l.b16 %v389
    %v579 = vunpack.c.h.b16 %v389
    %v580 = vunpack.c.l.b16 %v390
    %v581 = vunpack.c.h.b16 %v390
    %v582 = vunpack.c.l.b16 %v391
    %v583 = vunpack.c.h.b16 %v391
    %v584 = vunpack.c.l.b16 %v392
    %v585 = vunpack.c.h.b16 %v392
    %v586 = vunpack.c.l.b16 %v393
    %v587 = vunpack.c.h.b16 %v393
    %v588 = vpack.c.b16 %v464, %v460
    %v589 = vpack.c.b16 %v465, %v461
    %v590 = vpack.c.b16 %v466, %v462
    %v591 = vpack.c.b16 %v467, %v463
    %v592 = vpack.c.b16 %v472, %v468
    %v593 = vpack.c.b16 %v473, %v469
    %v594 = vpack.c.b16 %v474, %v470
    %v595 = vpack.c.b16 %v475, %v471
    %v596 = vpack.c.b16 %v480, %v476
    %v597 = vpack.c.b16 %v481, %v477
    %v598 = vpack.c.b16 %v482, %v478
    %v599 = vpack.c.b16 %v483, %v479
    %v600 = vpack.c.b16 %v488, %v484
    %v601 = vpack.c.b16 %v489, %v485
    %v602 = vpack.c.b16 %v490, %v486
    %v603 = vpack.c.b16 %v491, %v487
    %v604 = vpack.c.b16 %v496, %v492
    %v605 = vpack.c.b16 %v497, %v493
    %v606 = vpack.c.b16 %v498, %v494
    %v607 = vpack.c.b16 %v499, %v495
    %v608 = vpack.c.b16 %v504, %v500
    %v609 = vpack.c.b16 %v505, %v501
    %v610 = vpack.c.b16 %v506, %v502
    %v611 = vpack.c.b16 %v507, %v503
    %v612 = vpack.c.b16 %v512, %v508
    %v613 = vpack.c.b16 %v513, %v509
    %v614 = vpack.c.b16 %v514, %v510
    %v615 = vpack.c.b16 %v515, %v511
    %v616 = vpack.c.b16 %v520, %v516
    %v617 = vpack.c.b16 %v521, %v517
    %v618 = vpack.c.b16 %v522, %v518
    %v619 = vpack.c.b16 %v523, %v519
    %v620 = vpack.c.b16 %v528, %v524
    %v621 = vpack.c.b16 %v529, %v525
    %v622 = vpack.c.b16 %v530, %v526
    %v623 = vpack.c.b16 %v531, %v527
    %v624 = vpack.c.b16 %v536, %v532
    %v625 = vpack.c.b16 %v537, %v533
    %v626 = vpack.c.b16 %v538, %v534
    %v627 = vpack.c.b16 %v539, %v535
    %v628 = vpack.c.b16 %v544, %v540
    %v629 = vpack.c.b16 %v545, %v541
    %v630 = vpack.c.b16 %v546, %v542
    %v631 = vpack.c.b16 %v547, %v543
    %v632 = vpack.c.b16 %v552, %v548
    %v633 = vpack.c.b16 %v553, %v549
    %v634 = vpack.c.b16 %v554, %v550
    %v635 = vpack.c.b16 %v555, %v551
    %v636 = vpack.c.b16 %v560, %v556
    %v637 = vpack.c.b16 %v561, %v557
    %v638 = vpack.c.b16 %v562, %v558
    %v639 = vpack.c.b16 %v563, %v559
    %v640 = vpack.c.b16 %v568, %v564
    %v641 = vpack.c.b16 %v569, %v565
    %v642 = vpack.c.b16 %v570, %v566
    %v643 = vpack.c.b16 %v571, %v567
    %v644 = vpack.c.b16 %v576, %v572
    %v645 = vpack.c.b16 %v577, %v573
    %v646 = vpack.c.b16 %v578, %v574
    %v647 = vpack.c.b16 %v579, %v575
    %v648 = vpack.c.b16 %v584, %v580
    %v649 = vpack.c.b16 %v585, %v581
    %v650 = vpack.c.b16 %v586, %v582
    %v651 = vpack.c.b16 %v587, %v583
    %716 = vmatprep.subr.bf16.mxu0 %v589
    %717 = vmatpush1.bf16.msra.mxu0 %v588
    %718 = vmatprep.subr.bf16.mxu0 %v593
    %719 = vmatpush1.bf16.msra.mxu0 %v592
    %720 = vmatprep.subr.bf16.mxu0 %v597
    %721 = vmatpush1.bf16.msra.mxu0 %v596
    %722 = vmatprep.subr.bf16.mxu0 %v601
    %723 = vmatpush1.bf16.msra.mxu0 %v600
    %724 = vmatprep.subr.bf16.mxu0 %v605
    %725 = vmatpush1.bf16.msra.mxu0 %v604
    %726 = vmatprep.subr.bf16.mxu0 %v609
    %727 = vmatpush1.bf16.msra.mxu0 %v608
    %728 = vmatprep.subr.bf16.mxu0 %v613
    %729 = vmatpush1.bf16.msra.mxu0 %v612
    %730 = vmatprep.subr.bf16.mxu0 %v617
    %731 = vmatpush1.bf16.msra.mxu0 %v616
    %732 = vmatprep.subr.bf16.mxu0 %v621
    %733 = vmatpush1.bf16.msra.mxu0 %v620
    %734 = vmatprep.subr.bf16.mxu0 %v625
    %735 = vmatpush1.bf16.msra.mxu0 %v624
    %736 = vmatprep.subr.bf16.mxu0 %v629
    %737 = vmatpush1.bf16.msra.mxu0 %v628
    %738 = vmatprep.subr.bf16.mxu0 %v633
    %739 = vmatpush1.bf16.msra.mxu0 %v632
    %740 = vmatprep.subr.bf16.mxu0 %v637
    %741 = vmatpush1.bf16.msra.mxu0 %v636
    %742 = vmatprep.subr.bf16.mxu0 %v641
    %743 = vmatpush1.bf16.msra.mxu0 %v640
    %744 = vmatprep.subr.bf16.mxu0 %v645
    %745 = vmatpush1.bf16.msra.mxu0 %v644
    %746 = vmatprep.subr.bf16.mxu0 %v649
    %747 = vmatpush1.bf16.msra.mxu0 %v648
    %748 = vmatprep.mubr.bf16.mxu0 %v395
    %749 = vmatmul.mubr.bf16.gmra.mrb[0].mxu0 %v394
    %v750 = vpop.f32.mrb[0].mxu0
    %v751 = vadd.f32 0.0, %v750
    %v752 = vpop.f32.mrb[0].mxu0
    %v753 = vadd.f32 0.0, %v752
    %v754 = vpop.f32.mrb[0].mxu0
    %v755 = vpop.f32.mrb[0].mxu0
    %756 = vdwg.mxu0
    %757 = vmatprep.subr.bf16.mxu0 %v591
    %758 = vmatpush1.bf16.msra.mxu0 %v590
    %759 = vmatprep.subr.bf16.mxu0 %v595
    %760 = vmatpush1.bf16.msra.mxu0 %v594
    %761 = vmatprep.subr.bf16.mxu0 %v599
    %762 = vmatpush1.bf16.msra.mxu0 %v598
    %763 = vmatprep.subr.bf16.mxu0 %v603
    %764 = vmatpush1.bf16.msra.mxu0 %v602
    %765 = vmatprep.subr.bf16.mxu0 %v607
    %766 = vmatpush1.bf16.msra.mxu0 %v606
    %767 = vmatprep.subr.bf16.mxu0 %v611
    %768 = vmatpush1.bf16.msra.mxu0 %v610
    %769 = vmatprep.subr.bf16.mxu0 %v615
    %770 = vmatpush1.bf16.msra.mxu0 %v614
    %771 = vmatprep.subr.bf16.mxu0 %v619
    %772 = vmatpush1.bf16.msra.mxu0 %v618
    %773 = vmatprep.subr.bf16.mxu0 %v623
    %774 = vmatpush1.bf16.msra.mxu0 %v622
    %775 = vmatprep.subr.bf16.mxu0 %v627
    %776 = vmatpush1.bf16.msra.mxu0 %v626
    %777 = vmatprep.subr.bf16.mxu0 %v631
    %778 = vmatpush1.bf16.msra.mxu0 %v630
    %779 = vmatprep.subr.bf16.mxu0 %v635
    %780 = vmatpush1.bf16.msra.mxu0 %v634
    %781 = vmatprep.subr.bf16.mxu0 %v639
    %782 = vmatpush1.bf16.msra.mxu0 %v638
    %783 = vmatprep.subr.bf16.mxu0 %v643
    %784 = vmatpush1.bf16.msra.mxu0 %v642
    %785 = vmatprep.subr.bf16.mxu0 %v647
    %786 = vmatpush1.bf16.msra.mxu0 %v646
    %787 = vmatprep.subr.bf16.mxu0 %v651
    %788 = vmatpush1.bf16.msra.mxu0 %v650
    %789 = vmatprep.mubr.bf16.mxu0 %v395
    %790 = vmatmul.mubr.bf16.gmra.mrb[0].mxu0 %v394
    %v791 = vpop.f32.mrb[0].mxu0
    %v792 = vadd.f32 0.0, %v791
    %v793 = vpop.f32.mrb[0].mxu0
    %v794 = vadd.f32 0.0, %v793
    %v795 = vpop.f32.mrb[0].mxu0
    %v796 = vpop.f32.mrb[0].mxu0
    %797 = vdwg.mxu0
    %v798 = vrot.slane %v751, 4
    %v799 = vadd.f32 %v751, %v798
    %v800 = vrot.slane %v799, 2
    %v801 = vadd.f32 %v799, %v800
    %v802 = vrot.slane %v801, 1
    %v803 = vadd.f32 %v801, %v802
    %v804 = vrot.slane %v753, 4
    %v805 = vadd.f32 %v753, %v804
    %v806 = vrot.slane %v805, 2
    %v807 = vadd.f32 %v805, %v806
    %v808 = vrot.slane %v807, 1
    %v809 = vadd.f32 %v807, %v808
    %v810 = vrot.slane %v792, 4
    %v811 = vadd.f32 %v792, %v810
    %v812 = vrot.slane %v811, 2
    %v813 = vadd.f32 %v811, %v812
    %v814 = vrot.slane %v813, 1
    %v815 = vadd.f32 %v813, %v814
    %v816 = vrot.slane %v794, 4
    %v817 = vadd.f32 %v794, %v816
    %v818 = vrot.slane %v817, 2
    %v819 = vadd.f32 %v817, %v818
    %v820 = vrot.slane %v819, 1
    %v821 = vadd.f32 %v819, %v820
    %v822 = vmul.f32 %v803, %v231
    %v823 = vmul.f32 %v809, %v231
    %v824 = vmul.f32 %v815, %v231
    %v825 = vmul.f32 %v821, %v231
    %v826 = vmul.f32 %v751, %v751
    %v827 = vmul.f32 %v753, %v753
    %v828 = vmul.f32 %v792, %v792
    %v829 = vmul.f32 %v794, %v794
    %v830 = vrot.slane %v826, 4
    %v831 = vadd.f32 %v826, %v830
    %v832 = vrot.slane %v831, 2
    %v833 = vadd.f32 %v831, %v832
    %v834 = vrot.slane %v833, 1
    %v835 = vadd.f32 %v833, %v834
    %v836 = vrot.slane %v827, 4
    %v837 = vadd.f32 %v827, %v836
    %v838 = vrot.slane %v837, 2
    %v839 = vadd.f32 %v837, %v838
    %v840 = vrot.slane %v839, 1
    %v841 = vadd.f32 %v839, %v840
    %v842 = vrot.slane %v828, 4
    %v843 = vadd.f32 %v828, %v842
    %v844 = vrot.slane %v843, 2
    %v845 = vadd.f32 %v843, %v844
    %v846 = vrot.slane %v845, 1
    %v847 = vadd.f32 %v845, %v846
    %v848 = vrot.slane %v829, 4
    %v849 = vadd.f32 %v829, %v848
    %v850 = vrot.slane %v849, 2
    %v851 = vadd.f32 %v849, %v850
    %v852 = vrot.slane %v851, 1
    %v853 = vadd.f32 %v851, %v852
    %v854 = vmul.f32 %v835, %v231
    %v855 = vmul.f32 %v841, %v231
    %v856 = vmul.f32 %v847, %v231
    %v857 = vmul.f32 %v853, %v231
    %v858 = vmul.f32 %v822, %v822
    %v859 = vmul.f32 %v823, %v823
    %v860 = vmul.f32 %v824, %v824
    %v861 = vmul.f32 %v825, %v825
    %v862 = vsub.f32 %v854, %v858
    %v863 = vsub.f32 %v855, %v859
    %v864 = vsub.f32 %v856, %v860
    %v865 = vsub.f32 %v857, %v861
    %v866 = vmax.f32 %v862, 0.0
    %v867 = vmax.f32 %v863, 0.0
    %v868 = vmax.f32 %v864, 0.0
    %v869 = vmax.f32 %v865, 0.0
    %v870 = vld [vmem:[#allocation13] sm:$0xf]
    %v871 = vadd.f32 %v866, 1e-05
    %v872 = vadd.f32 %v867, 1e-05
    %v873 = vadd.f32 %v868, 1e-05
    %v874 = vadd.f32 %v869, 1e-05
    %v875 = vrsqrt.pop %v871
    %v876 = vrsqrt.pop %v872
    %v877 = vrsqrt.pop %v873
    %v878 = vrsqrt.pop %v874
    %v883 = vcombine.low %v875, %v876
    %v884 = vcombine.low %v877, %v878
    %v886 = vunpack.c.l.s4 1966171168
    %v887 = vunpack.c.0.s8 %v886
    %v888 = vlaneseq
    %v889 = vshrl.u32 %v888, 7
    %v890 = vsub.s32 %v887, %v889
    %v891 = vrot.slane %v883, %v890
    %v893 = vunpack.c.l.s4 1966171168
    %v894 = vunpack.c.0.s8 %v893
    %v895 = vlaneseq
    %v896 = vshrl.u32 %v895, 7
    %v897 = vsub.s32 %v894, %v896
    %v898 = vrot.slane %v884, %v897
    %v899 = vcombine.low %v891, %v898
    %v901 = vunpack.c.l.s4 1966171168
    %v902 = vunpack.c.0.s8 %v901
    %v903 = vlaneseq
    %v904 = vshrl.u32 %v903, 7
    %v905 = vsub.s32 %v902, %v904
    %v906 = vrot.slane %v899, %v905
    %v908 = vmul.f32 %v870, %v906
    %v909 = vld [vmem:[%s6] sm:$0xf]
    %v911 = vlaneseq
    %v912 = vshrl.u32 %v911, 7
    %v913 = vsub.s32 0, %v912
    %v914 = vrot.slane %v908, %v913
    %v915 = vlaneseq
    %v916 = vshrl.u32 %v915, 7
    %v917 = vsub.s32 1, %v916
    %v918 = vrot.slane %v908, %v917
    %v919 = vlaneseq
    %v920 = vshrl.u32 %v919, 7
    %v921 = vsub.s32 2, %v920
    %v922 = vrot.slane %v908, %v921
    %v923 = vlaneseq
    %v924 = vshrl.u32 %v923, 7
    %v925 = vsub.s32 3, %v924
    %v926 = vrot.slane %v908, %v925
    %v931 = vmul.f32 %v822, %v914
    %v932 = vmul.f32 %v823, %v918
    %v933 = vmul.f32 %v824, %v922
    %v934 = vmul.f32 %v825, %v926
    %v939 = vcombine.low %v931, %v932
    %v940 = vcombine.low %v933, %v934
    %v942 = vunpack.c.l.s4 1966171168
    %v943 = vunpack.c.0.s8 %v942
    %v944 = vlaneseq
    %v945 = vshrl.u32 %v944, 7
    %v946 = vsub.s32 %v943, %v945
    %v947 = vrot.slane %v939, %v946
    %v949 = vunpack.c.l.s4 1966171168
    %v950 = vunpack.c.0.s8 %v949
    %v951 = vlaneseq
    %v952 = vshrl.u32 %v951, 7
    %v953 = vsub.s32 %v950, %v952
    %v954 = vrot.slane %v940, %v953
    %v955 = vcombine.low %v947, %v954
    %v957 = vunpack.c.l.s4 1966171168
    %v958 = vunpack.c.0.s8 %v957
    %v959 = vlaneseq
    %v960 = vshrl.u32 %v959, 7
    %v961 = vsub.s32 %v958, %v960
    %v962 = vrot.slane %v955, %v961
    %v964 = vsub.f32 %v909, %v962
    %v965 = vmul.f32 %v751, %v914
    %v966 = vmul.f32 %v753, %v918
    %v967 = vmul.f32 %v792, %v922
    %v968 = vmul.f32 %v794, %v926
    %v970 = vlaneseq
    %v971 = vshrl.u32 %v970, 7
    %v972 = vsub.s32 0, %v971
    %v973 = vrot.slane %v964, %v972
    %v974 = vlaneseq
    %v975 = vshrl.u32 %v974, 7
    %v976 = vsub.s32 1, %v975
    %v977 = vrot.slane %v964, %v976
    %v978 = vlaneseq
    %v979 = vshrl.u32 %v978, 7
    %v980 = vsub.s32 2, %v979
    %v981 = vrot.slane %v964, %v980
    %v982 = vlaneseq
    %v983 = vshrl.u32 %v982, 7
    %v984 = vsub.s32 3, %v983
    %v985 = vrot.slane %v964, %v984
    %v990 = vadd.f32 %v965, %v973
    %v991 = vadd.f32 %v966, %v977
    %v992 = vadd.f32 %v967, %v981
    %v993 = vadd.f32 %v968, %v985
    %v994 = vmax.f32 %v990, 0.0
    %v995 = vmax.f32 %v991, 0.0
    %v996 = vmax.f32 %v992, 0.0
    %v997 = vmax.f32 %v993, 0.0
    %s998 = smul.u32 4, 64
    %s999 = smul.u32 %s998, 8
    %s1000 = sshll.u32 %s999, 4
    %1001 = dma.done [#allocation4], %s1000
    %v1002 = vld [vmem:[#allocation2] sm:$0xff]
    %v1003 = vld [vmem:[#allocation2 + $0x8] sm:$0xff]
    %v1004 = vld [vmem:[#allocation2 + $0x10] sm:$0xff]
    %v1005 = vld [vmem:[#allocation2 + $0x18] sm:$0xff]
    %v1006 = vld [vmem:[#allocation2 + $0x20] sm:$0xff]
    %v1007 = vld [vmem:[#allocation2 + $0x28] sm:$0xff]
    %v1008 = vld [vmem:[#allocation2 + $0x30] sm:$0xff]
    %v1009 = vld [vmem:[#allocation2 + $0x38] sm:$0xff]
    %v1010 = vld [vmem:[#allocation2 + $0x40] sm:$0xff]
    %v1011 = vld [vmem:[#allocation2 + $0x48] sm:$0xff]
    %v1012 = vld [vmem:[#allocation2 + $0x50] sm:$0xff]
    %v1013 = vld [vmem:[#allocation2 + $0x58] sm:$0xff]
    %v1014 = vld [vmem:[#allocation2 + $0x60] sm:$0xff]
    %v1015 = vld [vmem:[#allocation2 + $0x68] sm:$0xff]
    %v1016 = vld [vmem:[#allocation2 + $0x70] sm:$0xff]
    %v1017 = vld [vmem:[#allocation2 + $0x78] sm:$0xff]
    %v1018 = vld [vmem:[#allocation2 + $0x80] sm:$0xff]
    %v1019 = vld [vmem:[#allocation2 + $0x88] sm:$0xff]
    %v1020 = vld [vmem:[#allocation2 + $0x90] sm:$0xff]
    %v1021 = vld [vmem:[#allocation2 + $0x98] sm:$0xff]
    %v1022 = vld [vmem:[#allocation2 + $0xa0] sm:$0xff]
    %v1023 = vld [vmem:[#allocation2 + $0xa8] sm:$0xff]
    %v1024 = vld [vmem:[#allocation2 + $0xb0] sm:$0xff]
    %v1025 = vld [vmem:[#allocation2 + $0xb8] sm:$0xff]
    %v1026 = vld [vmem:[#allocation2 + $0xc0] sm:$0xff]
    %v1027 = vld [vmem:[#allocation2 + $0xc8] sm:$0xff]
    %v1028 = vld [vmem:[#allocation2 + $0xd0] sm:$0xff]
    %v1029 = vld [vmem:[#allocation2 + $0xd8] sm:$0xff]
    %v1030 = vld [vmem:[#allocation2 + $0xe0] sm:$0xff]
    %v1031 = vld [vmem:[#allocation2 + $0xe8] sm:$0xff]
    %v1032 = vld [vmem:[#allocation2 + $0xf0] sm:$0xff]
    %v1033 = vld [vmem:[#allocation2 + $0xf8] sm:$0xff]
    %v1034 = vld [vmem:[#allocation2 + $0x100] sm:$0xff]
    %v1035 = vld [vmem:[#allocation2 + $0x108] sm:$0xff]
    %v1036 = vld [vmem:[#allocation2 + $0x110] sm:$0xff]
    %v1037 = vld [vmem:[#allocation2 + $0x118] sm:$0xff]
    %v1038 = vld [vmem:[#allocation2 + $0x120] sm:$0xff]
    %v1039 = vld [vmem:[#allocation2 + $0x128] sm:$0xff]
    %v1040 = vld [vmem:[#allocation2 + $0x130] sm:$0xff]
    %v1041 = vld [vmem:[#allocation2 + $0x138] sm:$0xff]
    %v1042 = vld [vmem:[#allocation2 + $0x140] sm:$0xff]
    %v1043 = vld [vmem:[#allocation2 + $0x148] sm:$0xff]
    %v1044 = vld [vmem:[#allocation2 + $0x150] sm:$0xff]
    %v1045 = vld [vmem:[#allocation2 + $0x158] sm:$0xff]
    %v1046 = vld [vmem:[#allocation2 + $0x160] sm:$0xff]
    %v1047 = vld [vmem:[#allocation2 + $0x168] sm:$0xff]
    %v1048 = vld [vmem:[#allocation2 + $0x170] sm:$0xff]
    %v1049 = vld [vmem:[#allocation2 + $0x178] sm:$0xff]
    %v1050 = vld [vmem:[#allocation2 + $0x180] sm:$0xff]
    %v1051 = vld [vmem:[#allocation2 + $0x188] sm:$0xff]
    %v1052 = vld [vmem:[#allocation2 + $0x190] sm:$0xff]
    %v1053 = vld [vmem:[#allocation2 + $0x198] sm:$0xff]
    %v1054 = vld [vmem:[#allocation2 + $0x1a0] sm:$0xff]
    %v1055 = vld [vmem:[#allocation2 + $0x1a8] sm:$0xff]
    %v1056 = vld [vmem:[#allocation2 + $0x1b0] sm:$0xff]
    %v1057 = vld [vmem:[#allocation2 + $0x1b8] sm:$0xff]
    %v1058 = vld [vmem:[#allocation2 + $0x1c0] sm:$0xff]
    %v1059 = vld [vmem:[#allocation2 + $0x1c8] sm:$0xff]
    %v1060 = vld [vmem:[#allocation2 + $0x1d0] sm:$0xff]
    %v1061 = vld [vmem:[#allocation2 + $0x1d8] sm:$0xff]
    %v1062 = vld [vmem:[#allocation2 + $0x1e0] sm:$0xff]
    %v1063 = vld [vmem:[#allocation2 + $0x1e8] sm:$0xff]
    %v1064 = vld [vmem:[#allocation2 + $0x1f0] sm:$0xff]
    %v1065 = vld [vmem:[#allocation2 + $0x1f8] sm:$0xff]
    %v1066 = vld [vmem:[#allocation2 + $0x200] sm:$0xff]
    %v1067 = vld [vmem:[#allocation2 + $0x208] sm:$0xff]
    %v1068 = vld [vmem:[#allocation2 + $0x210] sm:$0xff]
    %v1069 = vld [vmem:[#allocation2 + $0x218] sm:$0xff]
    %v1070 = vld [vmem:[#allocation2 + $0x220] sm:$0xff]
    %v1071 = vld [vmem:[#allocation2 + $0x228] sm:$0xff]
    %v1072 = vld [vmem:[#allocation2 + $0x230] sm:$0xff]
    %v1073 = vld [vmem:[#allocation2 + $0x238] sm:$0xff]
    %v1074 = vld [vmem:[#allocation2 + $0x240] sm:$0xff]
    %v1075 = vld [vmem:[#allocation2 + $0x248] sm:$0xff]
    %v1076 = vld [vmem:[#allocation2 + $0x250] sm:$0xff]
    %v1077 = vld [vmem:[#allocation2 + $0x258] sm:$0xff]
    %v1078 = vld [vmem:[#allocation2 + $0x260] sm:$0xff]
    %v1079 = vld [vmem:[#allocation2 + $0x268] sm:$0xff]
    %v1080 = vld [vmem:[#allocation2 + $0x270] sm:$0xff]
    %v1081 = vld [vmem:[#allocation2 + $0x278] sm:$0xff]
    %v1082 = vld [vmem:[#allocation2 + $0x280] sm:$0xff]
    %v1083 = vld [vmem:[#allocation2 + $0x288] sm:$0xff]
    %v1084 = vld [vmem:[#allocation2 + $0x290] sm:$0xff]
    %v1085 = vld [vmem:[#allocation2 + $0x298] sm:$0xff]
    %v1086 = vld [vmem:[#allocation2 + $0x2a0] sm:$0xff]
    %v1087 = vld [vmem:[#allocation2 + $0x2a8] sm:$0xff]
    %v1088 = vld [vmem:[#allocation2 + $0x2b0] sm:$0xff]
    %v1089 = vld [vmem:[#allocation2 + $0x2b8] sm:$0xff]
    %v1090 = vld [vmem:[#allocation2 + $0x2c0] sm:$0xff]
    %v1091 = vld [vmem:[#allocation2 + $0x2c8] sm:$0xff]
    %v1092 = vld [vmem:[#allocation2 + $0x2d0] sm:$0xff]
    %v1093 = vld [vmem:[#allocation2 + $0x2d8] sm:$0xff]
    %v1094 = vld [vmem:[#allocation2 + $0x2e0] sm:$0xff]
    %v1095 = vld [vmem:[#allocation2 + $0x2e8] sm:$0xff]
    %v1096 = vld [vmem:[#allocation2 + $0x2f0] sm:$0xff]
    %v1097 = vld [vmem:[#allocation2 + $0x2f8] sm:$0xff]
    %v1098 = vld [vmem:[#allocation2 + $0x300] sm:$0xff]
    %v1099 = vld [vmem:[#allocation2 + $0x308] sm:$0xff]
    %v1100 = vld [vmem:[#allocation2 + $0x310] sm:$0xff]
    %v1101 = vld [vmem:[#allocation2 + $0x318] sm:$0xff]
    %v1102 = vld [vmem:[#allocation2 + $0x320] sm:$0xff]
    %v1103 = vld [vmem:[#allocation2 + $0x328] sm:$0xff]
    %v1104 = vld [vmem:[#allocation2 + $0x330] sm:$0xff]
    %v1105 = vld [vmem:[#allocation2 + $0x338] sm:$0xff]
    %v1106 = vld [vmem:[#allocation2 + $0x340] sm:$0xff]
    %v1107 = vld [vmem:[#allocation2 + $0x348] sm:$0xff]
    %v1108 = vld [vmem:[#allocation2 + $0x350] sm:$0xff]
    %v1109 = vld [vmem:[#allocation2 + $0x358] sm:$0xff]
    %v1110 = vld [vmem:[#allocation2 + $0x360] sm:$0xff]
    %v1111 = vld [vmem:[#allocation2 + $0x368] sm:$0xff]
    %v1112 = vld [vmem:[#allocation2 + $0x370] sm:$0xff]
    %v1113 = vld [vmem:[#allocation2 + $0x378] sm:$0xff]
    %v1114 = vld [vmem:[#allocation2 + $0x380] sm:$0xff]
    %v1115 = vld [vmem:[#allocation2 + $0x388] sm:$0xff]
    %v1116 = vld [vmem:[#allocation2 + $0x390] sm:$0xff]
    %v1117 = vld [vmem:[#allocation2 + $0x398] sm:$0xff]
    %v1118 = vld [vmem:[#allocation2 + $0x3a0] sm:$0xff]
    %v1119 = vld [vmem:[#allocation2 + $0x3a8] sm:$0xff]
    %v1120 = vld [vmem:[#allocation2 + $0x3b0] sm:$0xff]
    %v1121 = vld [vmem:[#allocation2 + $0x3b8] sm:$0xff]
    %v1122 = vld [vmem:[#allocation2 + $0x3c0] sm:$0xff]
    %v1123 = vld [vmem:[#allocation2 + $0x3c8] sm:$0xff]
    %v1124 = vld [vmem:[#allocation2 + $0x3d0] sm:$0xff]
    %v1125 = vld [vmem:[#allocation2 + $0x3d8] sm:$0xff]
    %v1126 = vld [vmem:[#allocation2 + $0x3e0] sm:$0xff]
    %v1127 = vld [vmem:[#allocation2 + $0x3e8] sm:$0xff]
    %v1128 = vld [vmem:[#allocation2 + $0x3f0] sm:$0xff]
    %v1129 = vld [vmem:[#allocation2 + $0x3f8] sm:$0xff]
    %v1130 = vld [vmem:[#allocation2 + $0x400] sm:$0xff]
    %v1131 = vld [vmem:[#allocation2 + $0x408] sm:$0xff]
    %v1132 = vld [vmem:[#allocation2 + $0x410] sm:$0xff]
    %v1133 = vld [vmem:[#allocation2 + $0x418] sm:$0xff]
    %v1134 = vld [vmem:[#allocation2 + $0x420] sm:$0xff]
    %v1135 = vld [vmem:[#allocation2 + $0x428] sm:$0xff]
    %v1136 = vld [vmem:[#allocation2 + $0x430] sm:$0xff]
    %v1137 = vld [vmem:[#allocation2 + $0x438] sm:$0xff]
    %v1138 = vld [vmem:[#allocation2 + $0x440] sm:$0xff]
    %v1139 = vld [vmem:[#allocation2 + $0x448] sm:$0xff]
    %v1140 = vld [vmem:[#allocation2 + $0x450] sm:$0xff]
    %v1141 = vld [vmem:[#allocation2 + $0x458] sm:$0xff]
    %v1142 = vld [vmem:[#allocation2 + $0x460] sm:$0xff]
    %v1143 = vld [vmem:[#allocation2 + $0x468] sm:$0xff]
    %v1144 = vld [vmem:[#allocation2 + $0x470] sm:$0xff]
    %v1145 = vld [vmem:[#allocation2 + $0x478] sm:$0xff]
    %v1146 = vld [vmem:[#allocation2 + $0x480] sm:$0xff]
    %v1147 = vld [vmem:[#allocation2 + $0x488] sm:$0xff]
    %v1148 = vld [vmem:[#allocation2 + $0x490] sm:$0xff]
    %v1149 = vld [vmem:[#allocation2 + $0x498] sm:$0xff]
    %v1150 = vld [vmem:[#allocation2 + $0x4a0] sm:$0xff]
    %v1151 = vld [vmem:[#allocation2 + $0x4a8] sm:$0xff]
    %v1152 = vld [vmem:[#allocation2 + $0x4b0] sm:$0xff]
    %v1153 = vld [vmem:[#allocation2 + $0x4b8] sm:$0xff]
    %v1154 = vld [vmem:[#allocation2 + $0x4c0] sm:$0xff]
    %v1155 = vld [vmem:[#allocation2 + $0x4c8] sm:$0xff]
    %v1156 = vld [vmem:[#allocation2 + $0x4d0] sm:$0xff]
    %v1157 = vld [vmem:[#allocation2 + $0x4d8] sm:$0xff]
    %v1158 = vld [vmem:[#allocation2 + $0x4e0] sm:$0xff]
    %v1159 = vld [vmem:[#allocation2 + $0x4e8] sm:$0xff]
    %v1160 = vld [vmem:[#allocation2 + $0x4f0] sm:$0xff]
    %v1161 = vld [vmem:[#allocation2 + $0x4f8] sm:$0xff]
    %v1162 = vld [vmem:[#allocation2 + $0x500] sm:$0xff]
    %v1163 = vld [vmem:[#allocation2 + $0x508] sm:$0xff]
    %v1164 = vld [vmem:[#allocation2 + $0x510] sm:$0xff]
    %v1165 = vld [vmem:[#allocation2 + $0x518] sm:$0xff]
    %v1166 = vld [vmem:[#allocation2 + $0x520] sm:$0xff]
    %v1167 = vld [vmem:[#allocation2 + $0x528] sm:$0xff]
    %v1168 = vld [vmem:[#allocation2 + $0x530] sm:$0xff]
    %v1169 = vld [vmem:[#allocation2 + $0x538] sm:$0xff]
    %v1170 = vld [vmem:[#allocation2 + $0x540] sm:$0xff]
    %v1171 = vld [vmem:[#allocation2 + $0x548] sm:$0xff]
    %v1172 = vld [vmem:[#allocation2 + $0x550] sm:$0xff]
    %v1173 = vld [vmem:[#allocation2 + $0x558] sm:$0xff]
    %v1174 = vld [vmem:[#allocation2 + $0x560] sm:$0xff]
    %v1175 = vld [vmem:[#allocation2 + $0x568] sm:$0xff]
    %v1176 = vld [vmem:[#allocation2 + $0x570] sm:$0xff]
    %v1177 = vld [vmem:[#allocation2 + $0x578] sm:$0xff]
    %v1178 = vld [vmem:[#allocation2 + $0x580] sm:$0xff]
    %v1179 = vld [vmem:[#allocation2 + $0x588] sm:$0xff]
    %v1180 = vld [vmem:[#allocation2 + $0x590] sm:$0xff]
    %v1181 = vld [vmem:[#allocation2 + $0x598] sm:$0xff]
    %v1182 = vld [vmem:[#allocation2 + $0x5a0] sm:$0xff]
    %v1183 = vld [vmem:[#allocation2 + $0x5a8] sm:$0xff]
    %v1184 = vld [vmem:[#allocation2 + $0x5b0] sm:$0xff]
    %v1185 = vld [vmem:[#allocation2 + $0x5b8] sm:$0xff]
    %v1186 = vld [vmem:[#allocation2 + $0x5c0] sm:$0xff]
    %v1187 = vld [vmem:[#allocation2 + $0x5c8] sm:$0xff]
    %v1188 = vld [vmem:[#allocation2 + $0x5d0] sm:$0xff]
    %v1189 = vld [vmem:[#allocation2 + $0x5d8] sm:$0xff]
    %v1190 = vld [vmem:[#allocation2 + $0x5e0] sm:$0xff]
    %v1191 = vld [vmem:[#allocation2 + $0x5e8] sm:$0xff]
    %v1192 = vld [vmem:[#allocation2 + $0x5f0] sm:$0xff]
    %v1193 = vld [vmem:[#allocation2 + $0x5f8] sm:$0xff]
    %v1194 = vld [vmem:[#allocation2 + $0x600] sm:$0xff]
    %v1195 = vld [vmem:[#allocation2 + $0x608] sm:$0xff]
    %v1196 = vld [vmem:[#allocation2 + $0x610] sm:$0xff]
    %v1197 = vld [vmem:[#allocation2 + $0x618] sm:$0xff]
    %v1198 = vld [vmem:[#allocation2 + $0x620] sm:$0xff]
    %v1199 = vld [vmem:[#allocation2 + $0x628] sm:$0xff]
    %v1200 = vld [vmem:[#allocation2 + $0x630] sm:$0xff]
    %v1201 = vld [vmem:[#allocation2 + $0x638] sm:$0xff]
    %v1202 = vld [vmem:[#allocation2 + $0x640] sm:$0xff]
    %v1203 = vld [vmem:[#allocation2 + $0x648] sm:$0xff]
    %v1204 = vld [vmem:[#allocation2 + $0x650] sm:$0xff]
    %v1205 = vld [vmem:[#allocation2 + $0x658] sm:$0xff]
    %v1206 = vld [vmem:[#allocation2 + $0x660] sm:$0xff]
    %v1207 = vld [vmem:[#allocation2 + $0x668] sm:$0xff]
    %v1208 = vld [vmem:[#allocation2 + $0x670] sm:$0xff]
    %v1209 = vld [vmem:[#allocation2 + $0x678] sm:$0xff]
    %v1210 = vld [vmem:[#allocation2 + $0x680] sm:$0xff]
    %v1211 = vld [vmem:[#allocation2 + $0x688] sm:$0xff]
    %v1212 = vld [vmem:[#allocation2 + $0x690] sm:$0xff]
    %v1213 = vld [vmem:[#allocation2 + $0x698] sm:$0xff]
    %v1214 = vld [vmem:[#allocation2 + $0x6a0] sm:$0xff]
    %v1215 = vld [vmem:[#allocation2 + $0x6a8] sm:$0xff]
    %v1216 = vld [vmem:[#allocation2 + $0x6b0] sm:$0xff]
    %v1217 = vld [vmem:[#allocation2 + $0x6b8] sm:$0xff]
    %v1218 = vld [vmem:[#allocation2 + $0x6c0] sm:$0xff]
    %v1219 = vld [vmem:[#allocation2 + $0x6c8] sm:$0xff]
    %v1220 = vld [vmem:[#allocation2 + $0x6d0] sm:$0xff]
    %v1221 = vld [vmem:[#allocation2 + $0x6d8] sm:$0xff]
    %v1222 = vld [vmem:[#allocation2 + $0x6e0] sm:$0xff]
    %v1223 = vld [vmem:[#allocation2 + $0x6e8] sm:$0xff]
    %v1224 = vld [vmem:[#allocation2 + $0x6f0] sm:$0xff]
    %v1225 = vld [vmem:[#allocation2 + $0x6f8] sm:$0xff]
    %v1226 = vld [vmem:[#allocation2 + $0x700] sm:$0xff]
    %v1227 = vld [vmem:[#allocation2 + $0x708] sm:$0xff]
    %v1228 = vld [vmem:[#allocation2 + $0x710] sm:$0xff]
    %v1229 = vld [vmem:[#allocation2 + $0x718] sm:$0xff]
    %v1230 = vld [vmem:[#allocation2 + $0x720] sm:$0xff]
    %v1231 = vld [vmem:[#allocation2 + $0x728] sm:$0xff]
    %v1232 = vld [vmem:[#allocation2 + $0x730] sm:$0xff]
    %v1233 = vld [vmem:[#allocation2 + $0x738] sm:$0xff]
    %v1234 = vld [vmem:[#allocation2 + $0x740] sm:$0xff]
    %v1235 = vld [vmem:[#allocation2 + $0x748] sm:$0xff]
    %v1236 = vld [vmem:[#allocation2 + $0x750] sm:$0xff]
    %v1237 = vld [vmem:[#allocation2 + $0x758] sm:$0xff]
    %v1238 = vld [vmem:[#allocation2 + $0x760] sm:$0xff]
    %v1239 = vld [vmem:[#allocation2 + $0x768] sm:$0xff]
    %v1240 = vld [vmem:[#allocation2 + $0x770] sm:$0xff]
    %v1241 = vld [vmem:[#allocation2 + $0x778] sm:$0xff]
    %v1242 = vld [vmem:[#allocation2 + $0x780] sm:$0xff]
    %v1243 = vld [vmem:[#allocation2 + $0x788] sm:$0xff]
    %v1244 = vld [vmem:[#allocation2 + $0x790] sm:$0xff]
    %v1245 = vld [vmem:[#allocation2 + $0x798] sm:$0xff]
    %v1246 = vld [vmem:[#allocation2 + $0x7a0] sm:$0xff]
    %v1247 = vld [vmem:[#allocation2 + $0x7a8] sm:$0xff]
    %v1248 = vld [vmem:[#allocation2 + $0x7b0] sm:$0xff]
    %v1249 = vld [vmem:[#allocation2 + $0x7b8] sm:$0xff]
    %v1250 = vld [vmem:[#allocation2 + $0x7c0] sm:$0xff]
    %v1251 = vld [vmem:[#allocation2 + $0x7c8] sm:$0xff]
    %v1252 = vld [vmem:[#allocation2 + $0x7d0] sm:$0xff]
    %v1253 = vld [vmem:[#allocation2 + $0x7d8] sm:$0xff]
    %v1254 = vld [vmem:[#allocation2 + $0x7e0] sm:$0xff]
    %v1255 = vld [vmem:[#allocation2 + $0x7e8] sm:$0xff]
    %v1256 = vld [vmem:[#allocation2 + $0x7f0] sm:$0xff]
    %v1257 = vld [vmem:[#allocation2 + $0x7f8] sm:$0xff]
    %v1258 = vpack.c.bf16 %v994, %v994
    %v1259 = vpack.c.bf16 %v995, %v995
    %v1260 = vpack.c.bf16 %v996, %v996
    %v1261 = vpack.c.bf16 %v997, %v997
    %1262 = vmatprep.subr.bf16.mxu0 %v1003
    %1263 = vmatpush1.bf16.msra.mxu0 %v1002
    %1264 = vmatprep.subr.bf16.mxu0 %v1011
    %1265 = vmatpush1.bf16.msra.mxu0 %v1010
    %1266 = vmatprep.subr.bf16.mxu0 %v1019
    %1267 = vmatpush1.bf16.msra.mxu0 %v1018
    %1268 = vmatprep.subr.bf16.mxu0 %v1027
    %1269 = vmatpush1.bf16.msra.mxu0 %v1026
    %1270 = vmatprep.subr.bf16.mxu0 %v1035
    %1271 = vmatpush1.bf16.msra.mxu0 %v1034
    %1272 = vmatprep.subr.bf16.mxu0 %v1043
    %1273 = vmatpush1.bf16.msra.mxu0 %v1042
    %1274 = vmatprep.subr.bf16.mxu0 %v1051
    %1275 = vmatpush1.bf16.msra.mxu0 %v1050
    %1276 = vmatprep.subr.bf16.mxu0 %v1059
    %1277 = vmatpush1.bf16.msra.mxu0 %v1058
    %1278 = vmatprep.subr.bf16.mxu0 %v1067
    %1279 = vmatpush1.bf16.msra.mxu0 %v1066
    %1280 = vmatprep.subr.bf16.mxu0 %v1075
    %1281 = vmatpush1.bf16.msra.mxu0 %v1074
    %1282 = vmatprep.subr.bf16.mxu0 %v1083
    %1283 = vmatpush1.bf16.msra.mxu0 %v1082
    %1284 = vmatprep.subr.bf16.mxu0 %v1091
    %1285 = vmatpush1.bf16.msra.mxu0 %v1090
    %1286 = vmatprep.subr.bf16.mxu0 %v1099
    %1287 = vmatpush1.bf16.msra.mxu0 %v1098
    %1288 = vmatprep.subr.bf16.mxu0 %v1107
    %1289 = vmatpush1.bf16.msra.mxu0 %v1106
    %1290 = vmatprep.subr.bf16.mxu0 %v1115
    %1291 = vmatpush1.bf16.msra.mxu0 %v1114
    %1292 = vmatprep.subr.bf16.mxu0 %v1123
    %1293 = vmatpush1.bf16.msra.mxu0 %v1122
    %1294 = vmatprep.mubr.bf16.mxu0 %v1259
    %1295 = vmatmul.mubr.bf16.gmra.mrb[0].mxu0 %v1258
    %v1296 = vpop.f32.mrb[0].mxu0
    %v1297 = vadd.f32 0.0, %v1296
    %v1298 = vpop.f32.mrb[0].mxu0
    %v1299 = vadd.f32 0.0, %v1298
    %v1300 = vpop.f32.mrb[0].mxu0
    %v1301 = vpop.f32.mrb[0].mxu0
    %1302 = vdwg.mxu0
    %1303 = vmatprep.subr.bf16.mxu0 %v1131
    %1304 = vmatpush1.bf16.msra.mxu0 %v1130
    %1305 = vmatprep.subr.bf16.mxu0 %v1139
    %1306 = vmatpush1.bf16.msra.mxu0 %v1138
    %1307 = vmatprep.subr.bf16.mxu0 %v1147
    %1308 = vmatpush1.bf16.msra.mxu0 %v1146
    %1309 = vmatprep.subr.bf16.mxu0 %v1155
    %1310 = vmatpush1.bf16.msra.mxu0 %v1154
    %1311 = vmatprep.subr.bf16.mxu0 %v1163
    %1312 = vmatpush1.bf16.msra.mxu0 %v1162
    %1313 = vmatprep.subr.bf16.mxu0 %v1171
    %1314 = vmatpush1.bf16.msra.mxu0 %v1170
    %1315 = vmatprep.subr.bf16.mxu0 %v1179
    %1316 = vmatpush1.bf16.msra.mxu0 %v1178
    %1317 = vmatprep.subr.bf16.mxu0 %v1187
    %1318 = vmatpush1.bf16.msra.mxu0 %v1186
    %1319 = vmatprep.subr.bf16.mxu0 %v1195
    %1320 = vmatpush1.bf16.msra.mxu0 %v1194
    %1321 = vmatprep.subr.bf16.mxu0 %v1203
    %1322 = vmatpush1.bf16.msra.mxu0 %v1202
    %1323 = vmatprep.subr.bf16.mxu0 %v1211
    %1324 = vmatpush1.bf16.msra.mxu0 %v1210
    %1325 = vmatprep.subr.bf16.mxu0 %v1219
    %1326 = vmatpush1.bf16.msra.mxu0 %v1218
    %1327 = vmatprep.subr.bf16.mxu0 %v1227
    %1328 = vmatpush1.bf16.msra.mxu0 %v1226
    %1329 = vmatprep.subr.bf16.mxu0 %v1235
    %1330 = vmatpush1.bf16.msra.mxu0 %v1234
    %1331 = vmatprep.subr.bf16.mxu0 %v1243
    %1332 = vmatpush1.bf16.msra.mxu0 %v1242
    %1333 = vmatprep.subr.bf16.mxu0 %v1251
    %1334 = vmatpush1.bf16.msra.mxu0 %v1250
    %1335 = vmatprep.mubr.bf16.mxu0 %v1261
    %1336 = vmatmul.mubr.bf16.gmra.mrb[0].mxu0 %v1260
    %v1337 = vpop.f32.mrb[0].mxu0
    %v1338 = vadd.f32 %v1297, %v1337
    %v1339 = vpop.f32.mrb[0].mxu0
    %v1340 = vadd.f32 %v1299, %v1339
    %v1341 = vpop.f32.mrb[0].mxu0
    %v1342 = vpop.f32.mrb[0].mxu0
    %1343 = vdwg.mxu0
    %1344 = vmatprep.subr.bf16.mxu0 %v1005
    %1345 = vmatpush1.bf16.msra.mxu0 %v1004
    %1346 = vmatprep.subr.bf16.mxu0 %v1013
    %1347 = vmatpush1.bf16.msra.mxu0 %v1012
    %1348 = vmatprep.subr.bf16.mxu0 %v1021
    %1349 = vmatpush1.bf16.msra.mxu0 %v1020
    %1350 = vmatprep.subr.bf16.mxu0 %v1029
    %1351 = vmatpush1.bf16.msra.mxu0 %v1028
    %1352 = vmatprep.subr.bf16.mxu0 %v1037
    %1353 = vmatpush1.bf16.msra.mxu0 %v1036
    %1354 = vmatprep.subr.bf16.mxu0 %v1045
    %1355 = vmatpush1.bf16.msra.mxu0 %v1044
    %1356 = vmatprep.subr.bf16.mxu0 %v1053
    %1357 = vmatpush1.bf16.msra.mxu0 %v1052
    %1358 = vmatprep.subr.bf16.mxu0 %v1061
    %1359 = vmatpush1.bf16.msra.mxu0 %v1060
    %1360 = vmatprep.subr.bf16.mxu0 %v1069
    %1361 = vmatpush1.bf16.msra.mxu0 %v1068
    %1362 = vmatprep.subr.bf16.mxu0 %v1077
    %1363 = vmatpush1.bf16.msra.mxu0 %v1076
    %1364 = vmatprep.subr.bf16.mxu0 %v1085
    %1365 = vmatpush1.bf16.msra.mxu0 %v1084
    %1366 = vmatprep.subr.bf16.mxu0 %v1093
    %1367 = vmatpush1.bf16.msra.mxu0 %v1092
    %1368 = vmatprep.subr.bf16.mxu0 %v1101
    %1369 = vmatpush1.bf16.msra.mxu0 %v1100
    %1370 = vmatprep.subr.bf16.mxu0 %v1109
    %1371 = vmatpush1.bf16.msra.mxu0 %v1108
    %1372 = vmatprep.subr.bf16.mxu0 %v1117
    %1373 = vmatpush1.bf16.msra.mxu0 %v1116
    %1374 = vmatprep.subr.bf16.mxu0 %v1125
    %1375 = vmatpush1.bf16.msra.mxu0 %v1124
    %1376 = vmatprep.mubr.bf16.mxu0 %v1259
    %1377 = vmatmul.mubr.bf16.gmra.mrb[0].mxu0 %v1258
    %v1378 = vpop.f32.mrb[0].mxu0
    %v1379 = vadd.f32 0.0, %v1378
    %v1380 = vpop.f32.mrb[0].mxu0
    %v1381 = vadd.f32 0.0, %v1380
    %v1382 = vpop.f32.mrb[0].mxu0
    %v1383 = vpop.f32.mrb[0].mxu0
    %1384 = vdwg.mxu0
    %1385 = vmatprep.subr.bf16.mxu0 %v1133
    %1386 = vmatpush1.bf16.msra.mxu0 %v1132
    %1387 = vmatprep.subr.bf16.mxu0 %v1141
    %1388 = vmatpush1.bf16.msra.mxu0 %v1140
    %1389 = vmatprep.subr.bf16.mxu0 %v1149
    %1390 = vmatpush1.bf16.msra.mxu0 %v1148
    %1391 = vmatprep.subr.bf16.mxu0 %v1157
    %1392 = vmatpush1.bf16.msra.mxu0 %v1156
    %1393 = vmatprep.subr.bf16.mxu0 %v1165
    %1394 = vmatpush1.bf16.msra.mxu0 %v1164
    %1395 = vmatprep.subr.bf16.mxu0 %v1173
    %1396 = vmatpush1.bf16.msra.mxu0 %v1172
    %1397 = vmatprep.subr.bf16.mxu0 %v1181
    %1398 = vmatpush1.bf16.msra.mxu0 %v1180
    %1399 = vmatprep.subr.bf16.mxu0 %v1189
    %1400 = vmatpush1.bf16.msra.mxu0 %v1188
    %1401 = vmatprep.subr.bf16.mxu0 %v1197
    %1402 = vmatpush1.bf16.msra.mxu0 %v1196
    %1403 = vmatprep.subr.bf16.mxu0 %v1205
    %1404 = vmatpush1.bf16.msra.mxu0 %v1204
    %1405 = vmatprep.subr.bf16.mxu0 %v1213
    %1406 = vmatpush1.bf16.msra.mxu0 %v1212
    %1407 = vmatprep.subr.bf16.mxu0 %v1221
    %1408 = vmatpush1.bf16.msra.mxu0 %v1220
    %1409 = vmatprep.subr.bf16.mxu0 %v1229
    %1410 = vmatpush1.bf16.msra.mxu0 %v1228
    %1411 = vmatprep.subr.bf16.mxu0 %v1237
    %1412 = vmatpush1.bf16.msra.mxu0 %v1236
    %1413 = vmatprep.subr.bf16.mxu0 %v1245
    %1414 = vmatpush1.bf16.msra.mxu0 %v1244
    %1415 = vmatprep.subr.bf16.mxu0 %v1253
    %1416 = vmatpush1.bf16.msra.mxu0 %v1252
    %1417 = vmatprep.mubr.bf16.mxu0 %v1261
    %1418 = vmatmul.mubr.bf16.gmra.mrb[0].mxu0 %v1260
    %v1419 = vpop.f32.mrb[0].mxu0
    %v1420 = vadd.f32 %v1379, %v1419
    %v1421 = vpop.f32.mrb[0].mxu0
    %v1422 = vadd.f32 %v1381, %v1421
    %v1423 = vpop.f32.mrb[0].mxu0
    %v1424 = vpop.f32.mrb[0].mxu0
    %1425 = vdwg.mxu0
    %1426 = vmatprep.subr.bf16.mxu0 %v1007
    %1427 = vmatpush1.bf16.msra.mxu0 %v1006
    %1428 = vmatprep.subr.bf16.mxu0 %v1015
    %1429 = vmatpush1.bf16.msra.mxu0 %v1014
    %1430 = vmatprep.subr.bf16.mxu0 %v1023
    %1431 = vmatpush1.bf16.msra.mxu0 %v1022
    %1432 = vmatprep.subr.bf16.mxu0 %v1031
    %1433 = vmatpush1.bf16.msra.mxu0 %v1030
    %1434 = vmatprep.subr.bf16.mxu0 %v1039
    %1435 = vmatpush1.bf16.msra.mxu0 %v1038
    %1436 = vmatprep.subr.bf16.mxu0 %v1047
    %1437 = vmatpush1.bf16.msra.mxu0 %v1046
    %1438 = vmatprep.subr.bf16.mxu0 %v1055
    %1439 = vmatpush1.bf16.msra.mxu0 %v1054
    %1440 = vmatprep.subr.bf16.mxu0 %v1063
    %1441 = vmatpush1.bf16.msra.mxu0 %v1062
    %1442 = vmatprep.subr.bf16.mxu0 %v1071
    %1443 = vmatpush1.bf16.msra.mxu0 %v1070
    %1444 = vmatprep.subr.bf16.mxu0 %v1079
    %1445 = vmatpush1.bf16.msra.mxu0 %v1078
    %1446 = vmatprep.subr.bf16.mxu0 %v1087
    %1447 = vmatpush1.bf16.msra.mxu0 %v1086
    %1448 = vmatprep.subr.bf16.mxu0 %v1095
    %1449 = vmatpush1.bf16.msra.mxu0 %v1094
    %1450 = vmatprep.subr.bf16.mxu0 %v1103
    %1451 = vmatpush1.bf16.msra.mxu0 %v1102
    %1452 = vmatprep.subr.bf16.mxu0 %v1111
    %1453 = vmatpush1.bf16.msra.mxu0 %v1110
    %1454 = vmatprep.subr.bf16.mxu0 %v1119
    %1455 = vmatpush1.bf16.msra.mxu0 %v1118
    %1456 = vmatprep.subr.bf16.mxu0 %v1127
    %1457 = vmatpush1.bf16.msra.mxu0 %v1126
    %1458 = vmatprep.mubr.bf16.mxu0 %v1259
    %1459 = vmatmul.mubr.bf16.gmra.mrb[0].mxu0 %v1258
    %v1460 = vpop.f32.mrb[0].mxu0
    %v1461 = vadd.f32 0.0, %v1460
    %v1462 = vpop.f32.mrb[0].mxu0
    %v1463 = vadd.f32 0.0, %v1462
    %v1464 = vpop.f32.mrb[0].mxu0
    %v1465 = vpop.f32.mrb[0].mxu0
    %1466 = vdwg.mxu0
    %1467 = vmatprep.subr.bf16.mxu0 %v1135
    %1468 = vmatpush1.bf16.msra.mxu0 %v1134
    %1469 = vmatprep.subr.bf16.mxu0 %v1143
    %1470 = vmatpush1.bf16.msra.mxu0 %v1142
    %1471 = vmatprep.subr.bf16.mxu0 %v1151
    %1472 = vmatpush1.bf16.msra.mxu0 %v1150
    %1473 = vmatprep.subr.bf16.mxu0 %v1159
    %1474 = vmatpush1.bf16.msra.mxu0 %v1158
    %1475 = vmatprep.subr.bf16.mxu0 %v1167
    %1476 = vmatpush1.bf16.msra.mxu0 %v1166
    %1477 = vmatprep.subr.bf16.mxu0 %v1175
    %1478 = vmatpush1.bf16.msra.mxu0 %v1174
    %1479 = vmatprep.subr.bf16.mxu0 %v1183
    %1480 = vmatpush1.bf16.msra.mxu0 %v1182
    %1481 = vmatprep.subr.bf16.mxu0 %v1191
    %1482 = vmatpush1.bf16.msra.mxu0 %v1190
    %1483 = vmatprep.subr.bf16.mxu0 %v1199
    %1484 = vmatpush1.bf16.msra.mxu0 %v1198
    %1485 = vmatprep.subr.bf16.mxu0 %v1207
    %1486 = vmatpush1.bf16.msra.mxu0 %v1206
    %1487 = vmatprep.subr.bf16.mxu0 %v1215
    %1488 = vmatpush1.bf16.msra.mxu0 %v1214
    %1489 = vmatprep.subr.bf16.mxu0 %v1223
    %1490 = vmatpush1.bf16.msra.mxu0 %v1222
    %1491 = vmatprep.subr.bf16.mxu0 %v1231
    %1492 = vmatpush1.bf16.msra.mxu0 %v1230
    %1493 = vmatprep.subr.bf16.mxu0 %v1239
    %1494 = vmatpush1.bf16.msra.mxu0 %v1238
    %1495 = vmatprep.subr.bf16.mxu0 %v1247
    %1496 = vmatpush1.bf16.msra.mxu0 %v1246
    %1497 = vmatprep.subr.bf16.mxu0 %v1255
    %1498 = vmatpush1.bf16.msra.mxu0 %v1254
    %1499 = vmatprep.mubr.bf16.mxu0 %v1261
    %1500 = vmatmul.mubr.bf16.gmra.mrb[0].mxu0 %v1260
    %v1501 = vpop.f32.mrb[0].mxu0
    %v1502 = vadd.f32 %v1461, %v1501
    %v1503 = vpop.f32.mrb[0].mxu0
    %v1504 = vadd.f32 %v1463, %v1503
    %v1505 = vpop.f32.mrb[0].mxu0
    %v1506 = vpop.f32.mrb[0].mxu0
    %1507 = vdwg.mxu0
    %1508 = vmatprep.subr.bf16.mxu0 %v1009
    %1509 = vmatpush1.bf16.msra.mxu0 %v1008
    %1510 = vmatprep.subr.bf16.mxu0 %v1017
    %1511 = vmatpush1.bf16.msra.mxu0 %v1016
    %1512 = vmatprep.subr.bf16.mxu0 %v1025
    %1513 = vmatpush1.bf16.msra.mxu0 %v1024
    %1514 = vmatprep.subr.bf16.mxu0 %v1033
    %1515 = vmatpush1.bf16.msra.mxu0 %v1032
    %1516 = vmatprep.subr.bf16.mxu0 %v1041
    %1517 = vmatpush1.bf16.msra.mxu0 %v1040
    %1518 = vmatprep.subr.bf16.mxu0 %v1049
    %1519 = vmatpush1.bf16.msra.mxu0 %v1048
    %1520 = vmatprep.subr.bf16.mxu0 %v1057
    %1521 = vmatpush1.bf16.msra.mxu0 %v1056
    %1522 = vmatprep.subr.bf16.mxu0 %v1065
    %1523 = vmatpush1.bf16.msra.mxu0 %v1064
    %1524 = vmatprep.subr.bf16.mxu0 %v1073
    %1525 = vmatpush1.bf16.msra.mxu0 %v1072
    %1526 = vmatprep.subr.bf16.mxu0 %v1081
    %1527 = vmatpush1.bf16.msra.mxu0 %v1080
    %1528 = vmatprep.subr.bf16.mxu0 %v1089
    %1529 = vmatpush1.bf16.msra.mxu0 %v1088
    %1530 = vmatprep.subr.bf16.mxu0 %v1097
    %1531 = vmatpush1.bf16.msra.mxu0 %v1096
    %1532 = vmatprep.subr.bf16.mxu0 %v1105
    %1533 = vmatpush1.bf16.msra.mxu0 %v1104
    %1534 = vmatprep.subr.bf16.mxu0 %v1113
    %1535 = vmatpush1.bf16.msra.mxu0 %v1112
    %1536 = vmatprep.subr.bf16.mxu0 %v1121
    %1537 = vmatpush1.bf16.msra.mxu0 %v1120
    %1538 = vmatprep.subr.bf16.mxu0 %v1129
    %1539 = vmatpush1.bf16.msra.mxu0 %v1128
    %1540 = vmatprep.mubr.bf16.mxu0 %v1259
    %1541 = vmatmul.mubr.bf16.gmra.mrb[0].mxu0 %v1258
    %v1542 = vpop.f32.mrb[0].mxu0
    %v1543 = vadd.f32 0.0, %v1542
    %v1544 = vpop.f32.mrb[0].mxu0
    %v1545 = vadd.f32 0.0, %v1544
    %v1546 = vpop.f32.mrb[0].mxu0
    %v1547 = vpop.f32.mrb[0].mxu0
    %1548 = vdwg.mxu0
    %1549 = vmatprep.subr.bf16.mxu0 %v1137
    %1550 = vmatpush1.bf16.msra.mxu0 %v1136
    %1551 = vmatprep.subr.bf16.mxu0 %v1145
    %1552 = vmatpush1.bf16.msra.mxu0 %v1144
    %1553 = vmatprep.subr.bf16.mxu0 %v1153
    %1554 = vmatpush1.bf16.msra.mxu0 %v1152
    %1555 = vmatprep.subr.bf16.mxu0 %v1161
    %1556 = vmatpush1.bf16.msra.mxu0 %v1160
    %1557 = vmatprep.subr.bf16.mxu0 %v1169
    %1558 = vmatpush1.bf16.msra.mxu0 %v1168
    %1559 = vmatprep.subr.bf16.mxu0 %v1177
    %1560 = vmatpush1.bf16.msra.mxu0 %v1176
    %1561 = vmatprep.subr.bf16.mxu0 %v1185
    %1562 = vmatpush1.bf16.msra.mxu0 %v1184
    %1563 = vmatprep.subr.bf16.mxu0 %v1193
    %1564 = vmatpush1.bf16.msra.mxu0 %v1192
    %1565 = vmatprep.subr.bf16.mxu0 %v1201
    %1566 = vmatpush1.bf16.msra.mxu0 %v1200
    %1567 = vmatprep.subr.bf16.mxu0 %v1209
    %1568 = vmatpush1.bf16.msra.mxu0 %v1208
    %1569 = vmatprep.subr.bf16.mxu0 %v1217
    %1570 = vmatpush1.bf16.msra.mxu0 %v1216
    %1571 = vmatprep.subr.bf16.mxu0 %v1225
    %1572 = vmatpush1.bf16.msra.mxu0 %v1224
    %1573 = vmatprep.subr.bf16.mxu0 %v1233
    %1574 = vmatpush1.bf16.msra.mxu0 %v1232
    %1575 = vmatprep.subr.bf16.mxu0 %v1241
    %1576 = vmatpush1.bf16.msra.mxu0 %v1240
    %1577 = vmatprep.subr.bf16.mxu0 %v1249
    %1578 = vmatpush1.bf16.msra.mxu0 %v1248
    %1579 = vmatprep.subr.bf16.mxu0 %v1257
    %1580 = vmatpush1.bf16.msra.mxu0 %v1256
    %1581 = vmatprep.mubr.bf16.mxu0 %v1261
    %1582 = vmatmul.mubr.bf16.gmra.mrb[0].mxu0 %v1260
    %v1583 = vpop.f32.mrb[0].mxu0
    %v1584 = vadd.f32 %v1543, %v1583
    %v1585 = vpop.f32.mrb[0].mxu0
    %v1586 = vadd.f32 %v1545, %v1585
    %v1587 = vpop.f32.mrb[0].mxu0
    %v1588 = vpop.f32.mrb[0].mxu0
    %1589 = vdwg.mxu0
    %v1590 = vrot.slane %v1338, 4
    %v1591 = vadd.f32 %v1338, %v1590
    %v1592 = vrot.slane %v1591, 2
    %v1593 = vadd.f32 %v1591, %v1592
    %v1594 = vrot.slane %v1593, 1
    %v1595 = vadd.f32 %v1593, %v1594
    %v1596 = vrot.slane %v1340, 4
    %v1597 = vadd.f32 %v1340, %v1596
    %v1598 = vrot.slane %v1597, 2
    %v1599 = vadd.f32 %v1597, %v1598
    %v1600 = vrot.slane %v1599, 1
    %v1601 = vadd.f32 %v1599, %v1600
    %v1602 = vrot.slane %v1420, 4
    %v1603 = vadd.f32 %v1420, %v1602
    %v1604 = vrot.slane %v1603, 2
    %v1605 = vadd.f32 %v1603, %v1604
    %v1606 = vrot.slane %v1605, 1
    %v1607 = vadd.f32 %v1605, %v1606
    %v1608 = vrot.slane %v1422, 4
    %v1609 = vadd.f32 %v1422, %v1608
    %v1610 = vrot.slane %v1609, 2
    %v1611 = vadd.f32 %v1609, %v1610
    %v1612 = vrot.slane %v1611, 1
    %v1613 = vadd.f32 %v1611, %v1612
    %v1614 = vrot.slane %v1502, 4
    %v1615 = vadd.f32 %v1502, %v1614
    %v1616 = vrot.slane %v1615, 2
    %v1617 = vadd.f32 %v1615, %v1616
    %v1618 = vrot.slane %v1617, 1
    %v1619 = vadd.f32 %v1617, %v1618
    %v1620 = vrot.slane %v1504, 4
    %v1621 = vadd.f32 %v1504, %v1620
    %v1622 = vrot.slane %v1621, 2
    %v1623 = vadd.f32 %v1621, %v1622
    %v1624 = vrot.slane %v1623, 1
    %v1625 = vadd.f32 %v1623, %v1624
    %v1626 = vrot.slane %v1584, 4
    %v1627 = vadd.f32 %v1584, %v1626
    %v1628 = vrot.slane %v1627, 2
    %v1629 = vadd.f32 %v1627, %v1628
    %v1630 = vrot.slane %v1629, 1
    %v1631 = vadd.f32 %v1629, %v1630
    %v1632 = vrot.slane %v1586, 4
    %v1633 = vadd.f32 %v1586, %v1632
    %v1634 = vrot.slane %v1633, 2
    %v1635 = vadd.f32 %v1633, %v1634
    %v1636 = vrot.slane %v1635, 1
    %v1637 = vadd.f32 %v1635, %v1636
    %v1638 = vmul.f32 %v1595, %v231
    %v1639 = vmul.f32 %v1601, %v231
    %v1640 = vmul.f32 %v1607, %v231
    %v1641 = vmul.f32 %v1613, %v231
    %v1642 = vmul.f32 %v1619, %v231
    %v1643 = vmul.f32 %v1625, %v231
    %v1644 = vmul.f32 %v1631, %v231
    %v1645 = vmul.f32 %v1637, %v231
    %v1646 = vmul.f32 %v1338, %v1338
    %v1647 = vmul.f32 %v1340, %v1340
    %v1648 = vmul.f32 %v1420, %v1420
    %v1649 = vmul.f32 %v1422, %v1422
    %v1650 = vmul.f32 %v1502, %v1502
    %v1651 = vmul.f32 %v1504, %v1504
    %v1652 = vmul.f32 %v1584, %v1584
    %v1653 = vmul.f32 %v1586, %v1586
    %v1654 = vrot.slane %v1646, 4
    %v1655 = vadd.f32 %v1646, %v1654
    %v1656 = vrot.slane %v1655, 2
    %v1657 = vadd.f32 %v1655, %v1656
    %v1658 = vrot.slane %v1657, 1
    %v1659 = vadd.f32 %v1657, %v1658
    %v1660 = vrot.slane %v1647, 4
    %v1661 = vadd.f32 %v1647, %v1660
    %v1662 = vrot.slane %v1661, 2
    %v1663 = vadd.f32 %v1661, %v1662
    %v1664 = vrot.slane %v1663, 1
    %v1665 = vadd.f32 %v1663, %v1664
    %v1666 = vrot.slane %v1648, 4
    %v1667 = vadd.f32 %v1648, %v1666
    %v1668 = vrot.slane %v1667, 2
    %v1669 = vadd.f32 %v1667, %v1668
    %v1670 = vrot.slane %v1669, 1
    %v1671 = vadd.f32 %v1669, %v1670
    %v1672 = vrot.slane %v1649, 4
    %v1673 = vadd.f32 %v1649, %v1672
    %v1674 = vrot.slane %v1673, 2
    %v1675 = vadd.f32 %v1673, %v1674
    %v1676 = vrot.slane %v1675, 1
    %v1677 = vadd.f32 %v1675, %v1676
    %v1678 = vrot.slane %v1650, 4
    %v1679 = vadd.f32 %v1650, %v1678
    %v1680 = vrot.slane %v1679, 2
    %v1681 = vadd.f32 %v1679, %v1680
    %v1682 = vrot.slane %v1681, 1
    %v1683 = vadd.f32 %v1681, %v1682
    %v1684 = vrot.slane %v1651, 4
    %v1685 = vadd.f32 %v1651, %v1684
    %v1686 = vrot.slane %v1685, 2
    %v1687 = vadd.f32 %v1685, %v1686
    %v1688 = vrot.slane %v1687, 1
    %v1689 = vadd.f32 %v1687, %v1688
    %v1690 = vrot.slane %v1652, 4
    %v1691 = vadd.f32 %v1652, %v1690
    %v1692 = vrot.slane %v1691, 2
    %v1693 = vadd.f32 %v1691, %v1692
    %v1694 = vrot.slane %v1693, 1
    %v1695 = vadd.f32 %v1693, %v1694
    %v1696 = vrot.slane %v1653, 4
    %v1697 = vadd.f32 %v1653, %v1696
    %v1698 = vrot.slane %v1697, 2
    %v1699 = vadd.f32 %v1697, %v1698
    %v1700 = vrot.slane %v1699, 1
    %v1701 = vadd.f32 %v1699, %v1700
    %v1702 = vmul.f32 %v1659, %v231
    %v1703 = vmul.f32 %v1665, %v231
    %v1704 = vmul.f32 %v1671, %v231
    %v1705 = vmul.f32 %v1677, %v231
    %v1706 = vmul.f32 %v1683, %v231
    %v1707 = vmul.f32 %v1689, %v231
    %v1708 = vmul.f32 %v1695, %v231
    %v1709 = vmul.f32 %v1701, %v231
    %v1710 = vmul.f32 %v1638, %v1638
    %v1711 = vmul.f32 %v1639, %v1639
    %v1712 = vmul.f32 %v1640, %v1640
    %v1713 = vmul.f32 %v1641, %v1641
    %v1714 = vmul.f32 %v1642, %v1642
    %v1715 = vmul.f32 %v1643, %v1643
    %v1716 = vmul.f32 %v1644, %v1644
    %v1717 = vmul.f32 %v1645, %v1645
    %v1718 = vsub.f32 %v1702, %v1710
    %v1719 = vsub.f32 %v1703, %v1711
    %v1720 = vsub.f32 %v1704, %v1712
    %v1721 = vsub.f32 %v1705, %v1713
    %v1722 = vsub.f32 %v1706, %v1714
    %v1723 = vsub.f32 %v1707, %v1715
    %v1724 = vsub.f32 %v1708, %v1716
    %v1725 = vsub.f32 %v1709, %v1717
    %v1726 = vmax.f32 %v1718, 0.0
    %v1727 = vmax.f32 %v1719, 0.0
    %v1728 = vmax.f32 %v1720, 0.0
    %v1729 = vmax.f32 %v1721, 0.0
    %v1730 = vmax.f32 %v1722, 0.0
    %v1731 = vmax.f32 %v1723, 0.0
    %v1732 = vmax.f32 %v1724, 0.0
    %v1733 = vmax.f32 %v1725, 0.0
    %v1734 = vld [vmem:[%s8] sm:$0xff]
    %v1735 = vadd.f32 %v1726, 1e-05
    %v1736 = vadd.f32 %v1727, 1e-05
    %v1737 = vadd.f32 %v1728, 1e-05
    %v1738 = vadd.f32 %v1729, 1e-05
    %v1739 = vadd.f32 %v1730, 1e-05
    %v1740 = vadd.f32 %v1731, 1e-05
    %v1741 = vadd.f32 %v1732, 1e-05
    %v1742 = vadd.f32 %v1733, 1e-05
    %v1743 = vrsqrt.pop %v1735
    %v1744 = vrsqrt.pop %v1736
    %v1745 = vrsqrt.pop %v1737
    %v1746 = vrsqrt.pop %v1738
    %v1747 = vrsqrt.pop %v1739
    %v1748 = vrsqrt.pop %v1740
    %v1749 = vrsqrt.pop %v1741
    %v1750 = vrsqrt.pop %v1742
    %v1759 = vcombine.low %v1743, %v1744
    %v1760 = vcombine.low %v1745, %v1746
    %v1761 = vcombine.low %v1747, %v1748
    %v1762 = vcombine.low %v1749, %v1750
    %v1764 = vunpack.c.l.s4 1966171168
    %v1765 = vunpack.c.0.s8 %v1764
    %v1766 = vlaneseq
    %v1767 = vshrl.u32 %v1766, 7
    %v1768 = vsub.s32 %v1765, %v1767
    %v1769 = vrot.slane %v1759, %v1768
    %v1771 = vunpack.c.l.s4 1966171168
    %v1772 = vunpack.c.0.s8 %v1771
    %v1773 = vlaneseq
    %v1774 = vshrl.u32 %v1773, 7
    %v1775 = vsub.s32 %v1772, %v1774
    %v1776 = vrot.slane %v1760, %v1775
    %v1778 = vunpack.c.l.s4 1966171168
    %v1779 = vunpack.c.0.s8 %v1778
    %v1780 = vlaneseq
    %v1781 = vshrl.u32 %v1780, 7
    %v1782 = vsub.s32 %v1779, %v1781
    %v1783 = vrot.slane %v1761, %v1782
    %v1785 = vunpack.c.l.s4 1966171168
    %v1786 = vunpack.c.0.s8 %v1785
    %v1787 = vlaneseq
    %v1788 = vshrl.u32 %v1787, 7
    %v1789 = vsub.s32 %v1786, %v1788
    %v1790 = vrot.slane %v1762, %v1789
    %v1791 = vcombine.low %v1769, %v1776
    %v1792 = vcombine.low %v1783, %v1790
    %v1794 = vunpack.c.l.s4 1966171168
    %v1795 = vunpack.c.0.s8 %v1794
    %v1796 = vlaneseq
    %v1797 = vshrl.u32 %v1796, 7
    %v1798 = vsub.s32 %v1795, %v1797
    %v1799 = vrot.slane %v1791, %v1798
    %v1801 = vunpack.c.l.s4 1966171168
    %v1802 = vunpack.c.0.s8 %v1801
    %v1803 = vlaneseq
    %v1804 = vshrl.u32 %v1803, 7
    %v1805 = vsub.s32 %v1802, %v1804
    %v1806 = vrot.slane %v1792, %v1805
    %v1807 = vcombine.low %v1799, %v1806
    %v1809 = vmul.f32 %v1734, %v1807
    %v1810 = vld [vmem:[%s9] sm:$0xff]
    %v1812 = vlaneseq
    %v1813 = vshrl.u32 %v1812, 7
    %v1814 = vsub.s32 0, %v1813
    %v1815 = vrot.slane %v1809, %v1814
    %v1816 = vlaneseq
    %v1817 = vshrl.u32 %v1816, 7
    %v1818 = vsub.s32 1, %v1817
    %v1819 = vrot.slane %v1809, %v1818
    %v1820 = vlaneseq
    %v1821 = vshrl.u32 %v1820, 7
    %v1822 = vsub.s32 2, %v1821
    %v1823 = vrot.slane %v1809, %v1822
    %v1824 = vlaneseq
    %v1825 = vshrl.u32 %v1824, 7
    %v1826 = vsub.s32 3, %v1825
    %v1827 = vrot.slane %v1809, %v1826
    %v1828 = vlaneseq
    %v1829 = vshrl.u32 %v1828, 7
    %v1830 = vsub.s32 4, %v1829
    %v1831 = vrot.slane %v1809, %v1830
    %v1832 = vlaneseq
    %v1833 = vshrl.u32 %v1832, 7
    %v1834 = vsub.s32 5, %v1833
    %v1835 = vrot.slane %v1809, %v1834
    %v1836 = vlaneseq
    %v1837 = vshrl.u32 %v1836, 7
    %v1838 = vsub.s32 6, %v1837
    %v1839 = vrot.slane %v1809, %v1838
    %v1840 = vlaneseq
    %v1841 = vshrl.u32 %v1840, 7
    %v1842 = vsub.s32 7, %v1841
    %v1843 = vrot.slane %v1809, %v1842
    %v1852 = vmul.f32 %v1638, %v1815
    %v1853 = vmul.f32 %v1639, %v1819
    %v1854 = vmul.f32 %v1640, %v1823
    %v1855 = vmul.f32 %v1641, %v1827
    %v1856 = vmul.f32 %v1642, %v1831
    %v1857 = vmul.f32 %v1643, %v1835
    %v1858 = vmul.f32 %v1644, %v1839
    %v1859 = vmul.f32 %v1645, %v1843
    %v1868 = vcombine.low %v1852, %v1853
    %v1869 = vcombine.low %v1854, %v1855
    %v1870 = vcombine.low %v1856, %v1857
    %v1871 = vcombine.low %v1858, %v1859
    %v1873 = vunpack.c.l.s4 1966171168
    %v1874 = vunpack.c.0.s8 %v1873
    %v1875 = vlaneseq
    %v1876 = vshrl.u32 %v1875, 7
    %v1877 = vsub.s32 %v1874, %v1876
    %v1878 = vrot.slane %v1868, %v1877
    %v1880 = vunpack.c.l.s4 1966171168
    %v1881 = vunpack.c.0.s8 %v1880
    %v1882 = vlaneseq
    %v1883 = vshrl.u32 %v1882, 7
    %v1884 = vsub.s32 %v1881, %v1883
    %v1885 = vrot.slane %v1869, %v1884
    %v1887 = vunpack.c.l.s4 1966171168
    %v1888 = vunpack.c.0.s8 %v1887
    %v1889 = vlaneseq
    %v1890 = vshrl.u32 %v1889, 7
    %v1891 = vsub.s32 %v1888, %v1890
    %v1892 = vrot.slane %v1870, %v1891
    %v1894 = vunpack.c.l.s4 1966171168
    %v1895 = vunpack.c.0.s8 %v1894
    %v1896 = vlaneseq
    %v1897 = vshrl.u32 %v1896, 7
    %v1898 = vsub.s32 %v1895, %v1897
    %v1899 = vrot.slane %v1871, %v1898
    %v1900 = vcombine.low %v1878, %v1885
    %v1901 = vcombine.low %v1892, %v1899
    %v1903 = vunpack.c.l.s4 1966171168
    %v1904 = vunpack.c.0.s8 %v1903
    %v1905 = vlaneseq
    %v1906 = vshrl.u32 %v1905, 7
    %v1907 = vsub.s32 %v1904, %v1906
    %v1908 = vrot.slane %v1900, %v1907
    %v1910 = vunpack.c.l.s4 1966171168
    %v1911 = vunpack.c.0.s8 %v1910
    %v1912 = vlaneseq
    %v1913 = vshrl.u32 %v1912, 7
    %v1914 = vsub.s32 %v1911, %v1913
    %v1915 = vrot.slane %v1901, %v1914
    %v1916 = vcombine.low %v1908, %v1915
    %v1918 = vsub.f32 %v1810, %v1916
    %v1919 = vmul.f32 %v1338, %v1815
    %v1920 = vmul.f32 %v1340, %v1819
    %v1921 = vmul.f32 %v1420, %v1823
    %v1922 = vmul.f32 %v1422, %v1827
    %v1923 = vmul.f32 %v1502, %v1831
    %v1924 = vmul.f32 %v1504, %v1835
    %v1925 = vmul.f32 %v1584, %v1839
    %v1926 = vmul.f32 %v1586, %v1843
    %v1928 = vlaneseq
    %v1929 = vshrl.u32 %v1928, 7
    %v1930 = vsub.s32 0, %v1929
    %v1931 = vrot.slane %v1918, %v1930
    %v1932 = vlaneseq
    %v1933 = vshrl.u32 %v1932, 7
    %v1934 = vsub.s32 1, %v1933
    %v1935 = vrot.slane %v1918, %v1934
    %v1936 = vlaneseq
    %v1937 = vshrl.u32 %v1936, 7
    %v1938 = vsub.s32 2, %v1937
    %v1939 = vrot.slane %v1918, %v1938
    %v1940 = vlaneseq
    %v1941 = vshrl.u32 %v1940, 7
    %v1942 = vsub.s32 3, %v1941
    %v1943 = vrot.slane %v1918, %v1942
    %v1944 = vlaneseq
    %v1945 = vshrl.u32 %v1944, 7
    %v1946 = vsub.s32 4, %v1945
    %v1947 = vrot.slane %v1918, %v1946
    %v1948 = vlaneseq
    %v1949 = vshrl.u32 %v1948, 7
    %v1950 = vsub.s32 5, %v1949
    %v1951 = vrot.slane %v1918, %v1950
    %v1952 = vlaneseq
    %v1953 = vshrl.u32 %v1952, 7
    %v1954 = vsub.s32 6, %v1953
    %v1955 = vrot.slane %v1918, %v1954
    %v1956 = vlaneseq
    %v1957 = vshrl.u32 %v1956, 7
    %v1958 = vsub.s32 7, %v1957
    %v1959 = vrot.slane %v1918, %v1958
    %v1968 = vadd.f32 %v1919, %v1931
    %v1969 = vadd.f32 %v1920, %v1935
    %v1970 = vadd.f32 %v1921, %v1939
    %v1971 = vadd.f32 %v1922, %v1943
    %v1972 = vadd.f32 %v1923, %v1947
    %v1973 = vadd.f32 %v1924, %v1951
    %v1974 = vadd.f32 %v1925, %v1955
    %v1975 = vadd.f32 %v1926, %v1959
    %v1976 = vmax.f32 %v1968, 0.0
    %v1977 = vmax.f32 %v1969, 0.0
    %v1978 = vmax.f32 %v1970, 0.0
    %v1979 = vmax.f32 %v1971, 0.0
    %v1980 = vmax.f32 %v1972, 0.0
    %v1981 = vmax.f32 %v1973, 0.0
    %v1982 = vmax.f32 %v1974, 0.0
    %v1983 = vmax.f32 %v1975, 0.0
    %s1984 = smul.u32 4, 128
    %s1985 = smul.u32 %s1984, 1
    %s1986 = sshll.u32 %s1985, 4
    %1987 = dma.done %s136, %s1986
    %v1988 = vld [vmem:[#allocation3] sm:$0xff]
    %v1989 = vld [vmem:[#allocation3 + $0x8] sm:$0xff]
    %v1990 = vld [vmem:[#allocation3 + $0x10] sm:$0xff]
    %v1991 = vld [vmem:[#allocation3 + $0x18] sm:$0xff]
    %v1992 = vld [vmem:[#allocation3 + $0x20] sm:$0xff]
    %v1993 = vld [vmem:[#allocation3 + $0x28] sm:$0xff]
    %v1994 = vld [vmem:[#allocation3 + $0x30] sm:$0xff]
    %v1995 = vld [vmem:[#allocation3 + $0x38] sm:$0xff]
    %v1996 = vld [vmem:[#allocation3 + $0x40] sm:$0xff]
    %v1997 = vld [vmem:[#allocation3 + $0x48] sm:$0xff]
    %v1998 = vld [vmem:[#allocation3 + $0x50] sm:$0xff]
    %v1999 = vld [vmem:[#allocation3 + $0x58] sm:$0xff]
    %v2000 = vld [vmem:[#allocation3 + $0x60] sm:$0xff]
    %v2001 = vld [vmem:[#allocation3 + $0x68] sm:$0xff]
    %v2002 = vld [vmem:[#allocation3 + $0x70] sm:$0xff]
    %v2003 = vld [vmem:[#allocation3 + $0x78] sm:$0xff]
    %v2004 = vld [vmem:[#allocation3 + $0x80] sm:$0xff]
    %v2005 = vld [vmem:[#allocation3 + $0x88] sm:$0xff]
    %v2006 = vld [vmem:[#allocation3 + $0x90] sm:$0xff]
    %v2007 = vld [vmem:[#allocation3 + $0x98] sm:$0xff]
    %v2008 = vld [vmem:[#allocation3 + $0xa0] sm:$0xff]
    %v2009 = vld [vmem:[#allocation3 + $0xa8] sm:$0xff]
    %v2010 = vld [vmem:[#allocation3 + $0xb0] sm:$0xff]
    %v2011 = vld [vmem:[#allocation3 + $0xb8] sm:$0xff]
    %v2012 = vld [vmem:[#allocation3 + $0xc0] sm:$0xff]
    %v2013 = vld [vmem:[#allocation3 + $0xc8] sm:$0xff]
    %v2014 = vld [vmem:[#allocation3 + $0xd0] sm:$0xff]
    %v2015 = vld [vmem:[#allocation3 + $0xd8] sm:$0xff]
    %v2016 = vld [vmem:[#allocation3 + $0xe0] sm:$0xff]
    %v2017 = vld [vmem:[#allocation3 + $0xe8] sm:$0xff]
    %v2018 = vld [vmem:[#allocation3 + $0xf0] sm:$0xff]
    %v2019 = vld [vmem:[#allocation3 + $0xf8] sm:$0xff]
    %v2020 = vld [vmem:[#allocation3 + $0x100] sm:$0xff]
    %v2021 = vld [vmem:[#allocation3 + $0x108] sm:$0xff]
    %v2022 = vld [vmem:[#allocation3 + $0x110] sm:$0xff]
    %v2023 = vld [vmem:[#allocation3 + $0x118] sm:$0xff]
    %v2024 = vld [vmem:[#allocation3 + $0x120] sm:$0xff]
    %v2025 = vld [vmem:[#allocation3 + $0x128] sm:$0xff]
    %v2026 = vld [vmem:[#allocation3 + $0x130] sm:$0xff]
    %v2027 = vld [vmem:[#allocation3 + $0x138] sm:$0xff]
    %v2028 = vld [vmem:[#allocation3 + $0x140] sm:$0xff]
    %v2029 = vld [vmem:[#allocation3 + $0x148] sm:$0xff]
    %v2030 = vld [vmem:[#allocation3 + $0x150] sm:$0xff]
    %v2031 = vld [vmem:[#allocation3 + $0x158] sm:$0xff]
    %v2032 = vld [vmem:[#allocation3 + $0x160] sm:$0xff]
    %v2033 = vld [vmem:[#allocation3 + $0x168] sm:$0xff]
    %v2034 = vld [vmem:[#allocation3 + $0x170] sm:$0xff]
    %v2035 = vld [vmem:[#allocation3 + $0x178] sm:$0xff]
    %v2036 = vld [vmem:[#allocation3 + $0x180] sm:$0xff]
    %v2037 = vld [vmem:[#allocation3 + $0x188] sm:$0xff]
    %v2038 = vld [vmem:[#allocation3 + $0x190] sm:$0xff]
    %v2039 = vld [vmem:[#allocation3 + $0x198] sm:$0xff]
    %v2040 = vld [vmem:[#allocation3 + $0x1a0] sm:$0xff]
    %v2041 = vld [vmem:[#allocation3 + $0x1a8] sm:$0xff]
    %v2042 = vld [vmem:[#allocation3 + $0x1b0] sm:$0xff]
    %v2043 = vld [vmem:[#allocation3 + $0x1b8] sm:$0xff]
    %v2044 = vld [vmem:[#allocation3 + $0x1c0] sm:$0xff]
    %v2045 = vld [vmem:[#allocation3 + $0x1c8] sm:$0xff]
    %v2046 = vld [vmem:[#allocation3 + $0x1d0] sm:$0xff]
    %v2047 = vld [vmem:[#allocation3 + $0x1d8] sm:$0xff]
    %v2048 = vld [vmem:[#allocation3 + $0x1e0] sm:$0xff]
    %v2049 = vld [vmem:[#allocation3 + $0x1e8] sm:$0xff]
    %v2050 = vld [vmem:[#allocation3 + $0x1f0] sm:$0xff]
    %v2051 = vld [vmem:[#allocation3 + $0x1f8] sm:$0xff]
    %v2052 = vpack.c.bf16 %v1976, %v1976
    %v2053 = vpack.c.bf16 %v1977, %v1977
    %v2054 = vpack.c.bf16 %v1978, %v1978
    %v2055 = vpack.c.bf16 %v1979, %v1979
    %v2056 = vpack.c.bf16 %v1980, %v1980
    %v2057 = vpack.c.bf16 %v1981, %v1981
    %v2058 = vpack.c.bf16 %v1982, %v1982
    %v2059 = vpack.c.bf16 %v1983, %v1983
    %v2060 = vld [vmem:[%s11] sm:$0x1]
    %v2062 = vlaneseq
    %v2063 = vshrl.u32 %v2062, 7
    %v2064 = vsub.s32 0, %v2063
    %v2065 = vrot.slane %v2060, %v2064
    %2067 = vmatprep.subr.bf16.mxu0 0
    %2068 = vmatpush1.bf16.msra.mxu0 %v1988
    %2069 = vmatprep.subr.bf16.mxu0 0
    %2070 = vmatpush1.bf16.msra.mxu0 %v1989
    %2071 = vmatprep.subr.bf16.mxu0 0
    %2072 = vmatpush1.bf16.msra.mxu0 %v1990
    %2073 = vmatprep.subr.bf16.mxu0 0
    %2074 = vmatpush1.bf16.msra.mxu0 %v1991
    %2075 = vmatprep.subr.bf16.mxu0 0
    %2076 = vmatpush1.bf16.msra.mxu0 %v1992
    %2077 = vmatprep.subr.bf16.mxu0 0
    %2078 = vmatpush1.bf16.msra.mxu0 %v1993
    %2079 = vmatprep.subr.bf16.mxu0 0
    %2080 = vmatpush1.bf16.msra.mxu0 %v1994
    %2081 = vmatprep.subr.bf16.mxu0 0
    %2082 = vmatpush1.bf16.msra.mxu0 %v1995
    %2083 = vmatprep.subr.bf16.mxu0 0
    %2084 = vmatpush1.bf16.msra.mxu0 %v1996
    %2085 = vmatprep.subr.bf16.mxu0 0
    %2086 = vmatpush1.bf16.msra.mxu0 %v1997
    %2087 = vmatprep.subr.bf16.mxu0 0
    %2088 = vmatpush1.bf16.msra.mxu0 %v1998
    %2089 = vmatprep.subr.bf16.mxu0 0
    %2090 = vmatpush1.bf16.msra.mxu0 %v1999
    %2091 = vmatprep.subr.bf16.mxu0 0
    %2092 = vmatpush1.bf16.msra.mxu0 %v2000
    %2093 = vmatprep.subr.bf16.mxu0 0
    %2094 = vmatpush1.bf16.msra.mxu0 %v2001
    %2095 = vmatprep.subr.bf16.mxu0 0
    %2096 = vmatpush1.bf16.msra.mxu0 %v2002
    %2097 = vmatprep.subr.bf16.mxu0 0
    %2098 = vmatpush1.bf16.msra.mxu0 %v2003
    %2099 = vmatprep.mubr.bf16.mxu0 %v2053
    %2100 = vmatmul.mubr.bf16.gmra.mrb[0].mxu0 %v2052
    %v2101 = vpop.f32.mrb[0].mxu0
    %v2102 = vadd.f32 %v2065, %v2101
    %v2103 = vpop.f32.mrb[0].mxu0
    %v2104 = vpop.f32.mrb[0].mxu0
    %v2105 = vpop.f32.mrb[0].mxu0
    %2106 = vdwg.mxu0
    %2107 = vmatprep.subr.bf16.mxu0 0
    %2108 = vmatpush1.bf16.msra.mxu0 %v2004
    %2109 = vmatprep.subr.bf16.mxu0 0
    %2110 = vmatpush1.bf16.msra.mxu0 %v2005
    %2111 = vmatprep.subr.bf16.mxu0 0
    %2112 = vmatpush1.bf16.msra.mxu0 %v2006
    %2113 = vmatprep.subr.bf16.mxu0 0
    %2114 = vmatpush1.bf16.msra.mxu0 %v2007
    %2115 = vmatprep.subr.bf16.mxu0 0
    %2116 = vmatpush1.bf16.msra.mxu0 %v2008
    %2117 = vmatprep.subr.bf16.mxu0 0
    %2118 = vmatpush1.bf16.msra.mxu0 %v2009
    %2119 = vmatprep.subr.bf16.mxu0 0
    %2120 = vmatpush1.bf16.msra.mxu0 %v2010
    %2121 = vmatprep.subr.bf16.mxu0 0
    %2122 = vmatpush1.bf16.msra.mxu0 %v2011
    %2123 = vmatprep.subr.bf16.mxu0 0
    %2124 = vmatpush1.bf16.msra.mxu0 %v2012
    %2125 = vmatprep.subr.bf16.mxu0 0
    %2126 = vmatpush1.bf16.msra.mxu0 %v2013
    %2127 = vmatprep.subr.bf16.mxu0 0
    %2128 = vmatpush1.bf16.msra.mxu0 %v2014
    %2129 = vmatprep.subr.bf16.mxu0 0
    %2130 = vmatpush1.bf16.msra.mxu0 %v2015
    %2131 = vmatprep.subr.bf16.mxu0 0
    %2132 = vmatpush1.bf16.msra.mxu0 %v2016
    %2133 = vmatprep.subr.bf16.mxu0 0
    %2134 = vmatpush1.bf16.msra.mxu0 %v2017
    %2135 = vmatprep.subr.bf16.mxu0 0
    %2136 = vmatpush1.bf16.msra.mxu0 %v2018
    %2137 = vmatprep.subr.bf16.mxu0 0
    %2138 = vmatpush1.bf16.msra.mxu0 %v2019
    %2139 = vmatprep.mubr.bf16.mxu0 %v2055
    %2140 = vmatmul.mubr.bf16.gmra.mrb[0].mxu0 %v2054
    %v2141 = vpop.f32.mrb[0].mxu0
    %v2142 = vadd.f32 %v2102, %v2141
    %v2143 = vpop.f32.mrb[0].mxu0
    %v2144 = vpop.f32.mrb[0].mxu0
    %v2145 = vpop.f32.mrb[0].mxu0
    %2146 = vdwg.mxu0
    %2147 = vmatprep.subr.bf16.mxu0 0
    %2148 = vmatpush1.bf16.msra.mxu0 %v2020
    %2149 = vmatprep.subr.bf16.mxu0 0
    %2150 = vmatpush1.bf16.msra.mxu0 %v2021
    %2151 = vmatprep.subr.bf16.mxu0 0
    %2152 = vmatpush1.bf16.msra.mxu0 %v2022
    %2153 = vmatprep.subr.bf16.mxu0 0
    %2154 = vmatpush1.bf16.msra.mxu0 %v2023
    %2155 = vmatprep.subr.bf16.mxu0 0
    %2156 = vmatpush1.bf16.msra.mxu0 %v2024
    %2157 = vmatprep.subr.bf16.mxu0 0
    %2158 = vmatpush1.bf16.msra.mxu0 %v2025
    %2159 = vmatprep.subr.bf16.mxu0 0
    %2160 = vmatpush1.bf16.msra.mxu0 %v2026
    %2161 = vmatprep.subr.bf16.mxu0 0
    %2162 = vmatpush1.bf16.msra.mxu0 %v2027
    %2163 = vmatprep.subr.bf16.mxu0 0
    %2164 = vmatpush1.bf16.msra.mxu0 %v2028
    %2165 = vmatprep.subr.bf16.mxu0 0
    %2166 = vmatpush1.bf16.msra.mxu0 %v2029
    %2167 = vmatprep.subr.bf16.mxu0 0
    %2168 = vmatpush1.bf16.msra.mxu0 %v2030
    %2169 = vmatprep.subr.bf16.mxu0 0
    %2170 = vmatpush1.bf16.msra.mxu0 %v2031
    %2171 = vmatprep.subr.bf16.mxu0 0
    %2172 = vmatpush1.bf16.msra.mxu0 %v2032
    %2173 = vmatprep.subr.bf16.mxu0 0
    %2174 = vmatpush1.bf16.msra.mxu0 %v2033
    %2175 = vmatprep.subr.bf16.mxu0 0
    %2176 = vmatpush1.bf16.msra.mxu0 %v2034
    %2177 = vmatprep.subr.bf16.mxu0 0
    %2178 = vmatpush1.bf16.msra.mxu0 %v2035
    %2179 = vmatprep.mubr.bf16.mxu0 %v2057
    %2180 = vmatmul.mubr.bf16.gmra.mrb[0].mxu0 %v2056
    %v2181 = vpop.f32.mrb[0].mxu0
    %v2182 = vadd.f32 %v2142, %v2181
    %v2183 = vpop.f32.mrb[0].mxu0
    %v2184 = vpop.f32.mrb[0].mxu0
    %v2185 = vpop.f32.mrb[0].mxu0
    %2186 = vdwg.mxu0
    %2187 = vmatprep.subr.bf16.mxu0 0
    %2188 = vmatpush1.bf16.msra.mxu0 %v2036
    %2189 = vmatprep.subr.bf16.mxu0 0
    %2190 = vmatpush1.bf16.msra.mxu0 %v2037
    %2191 = vmatprep.subr.bf16.mxu0 0
    %2192 = vmatpush1.bf16.msra.mxu0 %v2038
    %2193 = vmatprep.subr.bf16.mxu0 0
    %2194 = vmatpush1.bf16.msra.mxu0 %v2039
    %2195 = vmatprep.subr.bf16.mxu0 0
    %2196 = vmatpush1.bf16.msra.mxu0 %v2040
    %2197 = vmatprep.subr.bf16.mxu0 0
    %2198 = vmatpush1.bf16.msra.mxu0 %v2041
    %2199 = vmatprep.subr.bf16.mxu0 0
    %2200 = vmatpush1.bf16.msra.mxu0 %v2042
    %2201 = vmatprep.subr.bf16.mxu0 0
    %2202 = vmatpush1.bf16.msra.mxu0 %v2043
    %2203 = vmatprep.subr.bf16.mxu0 0
    %2204 = vmatpush1.bf16.msra.mxu0 %v2044
    %2205 = vmatprep.subr.bf16.mxu0 0
    %2206 = vmatpush1.bf16.msra.mxu0 %v2045
    %2207 = vmatprep.subr.bf16.mxu0 0
    %2208 = vmatpush1.bf16.msra.mxu0 %v2046
    %2209 = vmatprep.subr.bf16.mxu0 0
    %2210 = vmatpush1.bf16.msra.mxu0 %v2047
    %2211 = vmatprep.subr.bf16.mxu0 0
    %2212 = vmatpush1.bf16.msra.mxu0 %v2048
    %2213 = vmatprep.subr.bf16.mxu0 0
    %2214 = vmatpush1.bf16.msra.mxu0 %v2049
    %2215 = vmatprep.subr.bf16.mxu0 0
    %2216 = vmatpush1.bf16.msra.mxu0 %v2050
    %2217 = vmatprep.subr.bf16.mxu0 0
    %2218 = vmatpush1.bf16.msra.mxu0 %v2051
    %2219 = vmatprep.mubr.bf16.mxu0 %v2059
    %2220 = vmatmul.mubr.bf16.gmra.mrb[0].mxu0 %v2058
    %v2221 = vpop.f32.mrb[0].mxu0
    %v2222 = vadd.f32 %v2182, %v2221
    %v2223 = vpop.f32.mrb[0].mxu0
    %v2224 = vpop.f32.mrb[0].mxu0
    %v2225 = vpop.f32.mrb[0].mxu0
    %2226 = vdwg.mxu0
    %v2227 = vtanh.pop %v2222
    %2228 = vst [vmem:[#allocation14] sm:$0xff] %v2227
    // Predicated region
    $region66: #{generator_forward.1} parent=1 // pred_check
      _
    $region67: #{generator_forward.1} parent=1 // pred_check_branch
      %2230 = sbr.rel (0) target = $region69
    $region68: #{generator_forward.1} parent=1 // pred_region
      %s2232 = ssub.s32 128, 128
      %2233 = vsyncadd [#allocation7], %s2232
      %s2235 = sshll.u32 [#allocation14], 4
      %s2236 = int_to_ptr.vmem [resolvable:$true] %s2235
      %2238 = dma.vmem_to_hbm [thread:$0]  %s2236, 128, %s12, [#allocation7]
    $region69: #{generator_forward.1} parent=1 // pred_fallthru
      _
    // Predicated region
    $region70: #{generator_forward.1} parent=1 // pred_check
      _
    $region71: #{generator_forward.1} parent=1 // pred_check_branch
      %2240 = sbr.rel (0) target = $region73
    $region72: #{generator_forward.1} parent=1 // pred_region
      %2241 = dma.done [#allocation7], 128
    $region73: #{generator_forward.1} parent=1 // pred_fallthru
      _
    %2242 = vsyncpa [#allocation6], 1
    %2243 = vsyncpa [#allocation9], 1
    %2244 = vsyncpa [#allocation12], 1
    %2245 = vsyncpa [#allocation7], 1
  %2246 = vsyncmov [#allocation4]
  %s2247 = vpop.sfrf %2246
  %p2248 = scmp.eq.s32.totalorder %s2247, 0
  %p2249 = pneg %p2248
  %2251 = shalt.err (%p2249)
  %s2252 = scalar_lea.sflag [#allocation4], 1
  %2253 = vsyncmov %s2252
  %s2254 = vpop.sfrf %2253
  %p2255 = scmp.eq.s32.totalorder %s2254, 0
  %p2256 = pneg %p2255
  %2258 = shalt.err (%p2256)

</llo_original>
